<compile_context>
chip_gen: v7x
topology: tpu7x:2x2x1
jax: 0.10.0
libtpu: 0.0.40
codegen_flags: <defaults>
</compile_context>

<pallas_src>
import jax
import jax.numpy as jnp
from jax.experimental import pallas as pl
from jax.experimental.pallas import tpu as pltpu

C_IN = 512
C_OUT = 128
KSIZE = 3


def _conv_relu_pool(x_ref, w_ref, cb_ref, bt):
    """Conv1d(k=3, pad=1) -> ReLU -> max over L, for `bt` whole samples.

    x_ref : (bt*L, 512) bf16, sample-major rows
    w_ref : (512, 384) bf16; columns [k*128:(k+1)*128] hold conv tap k
    cb_ref: (1, 128) f32 conv bias
    returns (bt, 128) f32 pooled post-ReLU features.
    """
    m = x_ref.shape[0]
    L = m // bt

    x = x_ref[...]                                                    # (m, 512) bf16
    # One fused N=384 matmul: all three taps share the LHS (single MXU pass, f32 acc).
    y = jnp.dot(x, w_ref[...], preferred_element_type=jnp.float32)    # (m, 384)
    # 128-aligned static lane slices (free), then per-sample view (L % 8 == 0 keeps
    # these reshapes pure views).
    y0 = y[:, 0:C_OUT].reshape(bt, L, C_OUT)            # tap k=0
    y1 = y[:, C_OUT:2 * C_OUT].reshape(bt, L, C_OUT)    # tap k=1
    y2 = y[:, 2 * C_OUT:3 * C_OUT].reshape(bt, L, C_OUT)  # tap k=2

    # conv[b, l] = y0[b, l-1] + y1[b, l] + y2[b, l+1] with zero padding at each
    # sample's edges: implemented as zero-row shifts along L (no wrap-around, no masks,
    # no cross-sample leakage, non-negative shifts only).
    zero_row = jnp.zeros((bt, 1, C_OUT), jnp.float32)
    conv = (jnp.concatenate([zero_row, y0[:, :L - 1, :]], axis=1)
            + y1
            + jnp.concatenate([y2[:, 1:, :], zero_row], axis=1))      # (bt, L, 128)

    # AdaptiveMaxPool1d(1), with conv-bias + ReLU hoisted after the pool (exact: bias
    # is constant over L and ReLU is monotone).
    pooled = jnp.max(conv, axis=1)                                    # (bt, 128)
    return jnp.maximum(pooled + cb_ref[...], 0.0)


def _pooled_kernel(x_ref, w_ref, cb_ref, out_ref):
    # Lane-dense (bt, 128) pooled features; Linear(128->1) done in the wrapper.
    out_ref[...] = _conv_relu_pool(x_ref, w_ref, cb_ref, out_ref.shape[0])


def _fused_kernel(x_ref, w_ref, cb_ref, fcw_ref, fcb_ref, out_ref):
    # Small-problem variant: Linear(128->1) fused as a lane reduction in the epilogue
    # (avoids a second XLA dispatch in the latency-bound regime).
    feat = _conv_relu_pool(x_ref, w_ref, cb_ref, out_ref.shape[0])    # (bt, 128)
    out_ref[...] = jnp.sum(feat * fcw_ref[...], axis=1, keepdims=True) + fcb_ref[...]


def _tpu_generation():
    try:
        kind = jax.devices()[0].device_kind.lower()
    except Exception:
        kind = ""
    for g in (7, 6, 5):
        if f"v{g}" in kind:
            return g
    return 0  # unknown / interpret / CPU emulation


def _blocking_for_generation(gen):
    # (max rows per block, scoped-VMEM limit, prefer >=2 grid steps for megacore)
    if gen == 7:   # 2 TCs/chip, 64 MiB VMEM/TC: smaller per-TC block, keep parallel steps
        return 2048, 32 << 20, True
    if gen == 6:   # single TC, 128 MiB VMEM: one big block, no forced multi-step
        return 4096, 64 << 20, False
    if gen == 5:   # single TC, 16 MiB scoped default: raise the limit explicitly
        return 2048, 24 << 20, False
    return 2048, 32 << 20, False


def _choose_block_batch(B, L, max_rows, prefer_multi_step):
    """Samples per grid step: divides B, keeps (8,128)/(16,128)-aligned blocks, fills
    the MXU M dim; >=2 grid steps only when megacore sharding can use them (v7x)."""
    cands = []
    for d in range(1, B + 1):
        if B % d or d * L > max_rows:
            continue
        out_ok = (d % 8 == 0) or (d == B)
        in_ok = ((d * L) % 16 == 0) or (d == B)   # bf16 LHS packs 16 sublanes per vreg
        if out_ok and in_ok:
            cands.append(d)
    if not cands:
        # TODO(synk): for very long L, tile the sequence axis with an online running max.
        return B
    if prefer_multi_step:
        multi = [d for d in cands if B // d >= 2]
        if multi:
            return max(multi)
    return max(cands)


@jax.jit
def intro1dcnn_forward(x, conv_w, conv_b, fc_w, fc_b):
    """x: (B, L, 512) float32 (layout BEFORE the module's .permute). Returns (B,) f32."""
    B, L, _ = x.shape
    gen = _tpu_generation()
    max_rows, vmem_limit, prefer_multi = _blocking_for_generation(gen)
    bt = _choose_block_batch(B, L, max_rows, prefer_multi)

    x2 = x.reshape(B * L, C_IN).astype(jnp.bfloat16)          # free reshape, bf16 stream
    # Fused RHS: (512, 384); columns [k*128:(k+1)*128] = tap k of the conv weight.
    w_cat = jnp.transpose(conv_w, (1, 2, 0)).reshape(C_IN, KSIZE * C_OUT).astype(jnp.bfloat16)
    cb = conv_b.reshape(1, C_OUT).astype(jnp.float32)

    fuse_fc = (B * L) <= 1024   # latency-bound small regime: single kernel, no tail op

    cost = pl.CostEstimate(
        flops=2 * KSIZE * B * L * C_IN * C_OUT,
        transcendentals=0,
        bytes_accessed=x2.size * 2 + w_cat.size * 2 + cb.size * 4 + B * C_OUT * 4,
    )
    cparams = pltpu.CompilerParams(
        dimension_semantics=("parallel",),
        vmem_limit_bytes=vmem_limit,
    )
    # NOTE: w_cat / cb / fc params are grid-invariant; pipeline_mode=pl.Buffered(1)
    # would shave a little VMEM but is left at the default for robustness.

    if fuse_fc:
        fcw = fc_w.reshape(1, C_OUT).astype(jnp.float32)
        fcb = fc_b.reshape(1, 1).astype(jnp.float32)
        out = pl.pallas_call(
            _fused_kernel,
            out_shape=jax.ShapeDtypeStruct((B, 1), jnp.float32),
            grid=(B // bt,),
            in_specs=[
                pl.BlockSpec((bt * L, C_IN), lambda i: (i, 0)),
                pl.BlockSpec((C_IN, KSIZE * C_OUT), lambda i: (0, 0)),
                pl.BlockSpec((1, C_OUT), lambda i: (0, 0)),
                pl.BlockSpec((1, C_OUT), lambda i: (0, 0)),
                pl.BlockSpec((1, 1), lambda i: (0, 0)),
            ],
            out_specs=pl.BlockSpec((bt, 1), lambda i: (i, 0)),
            compiler_params=cparams,
            cost_estimate=cost,
        )(x2, w_cat, cb, fcw, fcb)
        return out[:, 0]

    pooled = pl.pallas_call(
        _pooled_kernel,
        out_shape=jax.ShapeDtypeStruct((B, C_OUT), jnp.float32),
        grid=(B // bt,),
        in_specs=[
            pl.BlockSpec((bt * L, C_IN), lambda i: (i, 0)),
            pl.BlockSpec((C_IN, KSIZE * C_OUT), lambda i: (0, 0)),
            pl.BlockSpec((1, C_OUT), lambda i: (0, 0)),
        ],
        out_specs=pl.BlockSpec((bt, C_OUT), lambda i: (i, 0)),
        compiler_params=cparams,
        cost_estimate=cost,
    )(x2, w_cat, cb)
    # Large-B*L path: lane-dense pooled output; Linear(128 -> 1) as one batched matmul.
    return pooled @ fc_w.reshape(C_OUT) + fc_b[0]


def _reference_forward(x, conv_w, conv_b, fc_w, fc_b):
    """Pure-JAX reference of the PyTorch forward (same bf16 matmul inputs as the kernel)."""
    B, L, _ = x.shape
    xb = x.astype(jnp.bfloat16)
    wb = conv_w.astype(jnp.bfloat16)
    xp = jnp.pad(xb, ((0, 0), (1, 1), (0, 0)))                        # (B, L+2, 512)
    windows = jnp.stack([xp[:, k:k + L, :] for k in range(KSIZE)], axis=0)  # (3,B,L,512)
    conv = jnp.einsum('kblc,ock->blo', windows, wb,
                      preferred_element_type=jnp.float32) + conv_b    # (B, L, 128)
    h = jnp.maximum(conv, 0.0)
    pooled = jnp.max(h, axis=1)                                       # (B, 128)
    return pooled @ fc_w.reshape(C_OUT) + fc_b[0]                     # (B,)


if __name__ == "__main__":
    key = jax.random.PRNGKey(0)
    k_x, k_w, k_b, k_fw, k_fb = jax.random.split(key, 5)

    B, L = 16, 16
    x = jax.random.normal(k_x, (B, L, C_IN), dtype=jnp.float32)

    # Deterministic synthetic parameters (shapes match nn.Conv1d / nn.Linear).
    conv_w = jax.random.normal(k_w, (C_OUT, C_IN, KSIZE), dtype=jnp.float32) * 0.02
    conv_b = jax.random.normal(k_b, (C_OUT,), dtype=jnp.float32) * 0.02
    fc_w = jax.random.normal(k_fw, (1, C_OUT), dtype=jnp.float32) * 0.1
    fc_b = jax.random.normal(k_fb, (1,), dtype=jnp.float32) * 0.1

    out = intro1dcnn_forward(x, conv_w, conv_b, fc_w, fc_b)
    out = jax.block_until_ready(out)

    ref = _reference_forward(x, conv_w, conv_b, fc_w, fc_b)
    assert out.shape == (B,)
    assert jnp.allclose(out, ref, atol=2e-3, rtol=2e-3), (out, ref)

    print("KERNEL_OK")
</pallas_src>

<mosaic_0001>
module attributes {stable_mosaic.version = 11 : i64} {
  func.func @_fused_kernel(%arg0: i32, %arg1: memref<256x512xbf16, #tpu.memory_space<vmem>>, %arg2: memref<512x384xbf16, #tpu.memory_space<vmem>>, %arg3: memref<1x128xf32, #tpu.memory_space<vmem>>, %arg4: memref<1x128xf32, #tpu.memory_space<vmem>>, %arg5: memref<1x1xf32, #tpu.memory_space<vmem>>, %arg6: memref<16x1xf32, #tpu.memory_space<vmem>>) attributes {dimension_semantics = [#tpu.dimension_semantics<parallel>], iteration_bounds = array<i64: 1>, scalar_prefetch = 0 : i64, scratch_operands = 0 : i64, tpu.core_type = #tpu.core_type<tc>, window_params = [{transform_indices = @transform_0, window_bounds = array<i64: 256, 512>}, {pipeline_mode = #tpu.pipeline_mode<synchronous>, transform_indices = @transform_1, window_bounds = array<i64: 512, 384>}, {pipeline_mode = #tpu.pipeline_mode<synchronous>, transform_indices = @transform_2, window_bounds = array<i64: 1, 128>}, {pipeline_mode = #tpu.pipeline_mode<synchronous>, transform_indices = @transform_3, window_bounds = array<i64: 1, 128>}, {pipeline_mode = #tpu.pipeline_mode<synchronous>, transform_indices = @transform_4, window_bounds = array<i64: 1, 1>}, {transform_indices = @transform_5, window_bounds = array<i64: 16, 1>}]} {
    %c0 = arith.constant 0 : index
    %c0_0 = arith.constant 0 : index
    %0 = vector.load %arg1[%c0, %c0_0] : memref<256x512xbf16, #tpu.memory_space<vmem>>, vector<256x512xbf16>
    %c0_1 = arith.constant 0 : index
    %c0_2 = arith.constant 0 : index
    %1 = vector.load %arg2[%c0_1, %c0_2] : memref<512x384xbf16, #tpu.memory_space<vmem>>, vector<512x384xbf16>
    %cst = arith.constant dense<0.000000e+00> : vector<256x384xf32>
    %2 = tpu.matmul %0, %1, %cst {dimension_numbers = #tpu.dot_dimension_numbers<[1], [0], [0], [1], [0, 0, 1, 1], [], []>} : vector<256x512xbf16>, vector<512x384xbf16>, vector<256x384xf32> -> vector<256x384xf32>
    %3 = vector.extract_strided_slice %2 {offsets = [0, 0], sizes = [256, 128], strides = [1, 1]} : vector<256x384xf32> to vector<256x128xf32>
    %4 = vector.shape_cast %3 : vector<256x128xf32> to vector<16x16x128xf32>
    %5 = vector.extract_strided_slice %2 {offsets = [0, 128], sizes = [256, 128], strides = [1, 1]} : vector<256x384xf32> to vector<256x128xf32>
    %6 = vector.shape_cast %5 : vector<256x128xf32> to vector<16x16x128xf32>
    %7 = vector.extract_strided_slice %2 {offsets = [0, 256], sizes = [256, 128], strides = [1, 1]} : vector<256x384xf32> to vector<256x128xf32>
    %8 = vector.shape_cast %7 : vector<256x128xf32> to vector<16x16x128xf32>
    %cst_3 = arith.constant 0.000000e+00 : f32
    %9 = vector.broadcast %cst_3 : f32 to vector<16x1x128xf32>
    %10 = vector.extract_strided_slice %4 {offsets = [0, 0, 0], sizes = [16, 15, 128], strides = [1, 1, 1]} : vector<16x16x128xf32> to vector<16x15x128xf32>
    %11 = tpu.concatenate %9, %10 in 1 : vector<16x1x128xf32>, vector<16x15x128xf32> -> vector<16x16x128xf32>
    %12 = arith.addf %11, %6 : vector<16x16x128xf32>
    %13 = vector.extract_strided_slice %8 {offsets = [0, 1, 0], sizes = [16, 15, 128], strides = [1, 1, 1]} : vector<16x16x128xf32> to vector<16x15x128xf32>
    %14 = tpu.concatenate %13, %9 in 1 : vector<16x15x128xf32>, vector<16x1x128xf32> -> vector<16x16x128xf32>
    %15 = arith.addf %12, %14 : vector<16x16x128xf32>
    %cst_4 = arith.constant dense<0xFF800000> : vector<16x128xf32>
    %16 = vector.multi_reduction <maximumf>, %15, %cst_4 [1] : vector<16x16x128xf32> to vector<16x128xf32>
    %c0_5 = arith.constant 0 : index
    %c0_6 = arith.constant 0 : index
    %17 = vector.load %arg3[%c0_5, %c0_6] : memref<1x128xf32, #tpu.memory_space<vmem>>, vector<1x128xf32>
    %18 = vector.broadcast %17 : vector<1x128xf32> to vector<16x128xf32>
    %19 = arith.addf %16, %18 : vector<16x128xf32>
    %cst_7 = arith.constant 0.000000e+00 : f32
    %20 = vector.broadcast %cst_7 : f32 to vector<16x128xf32>
    %21 = arith.maximumf %19, %20 : vector<16x128xf32>
    %c0_8 = arith.constant 0 : index
    %c0_9 = arith.constant 0 : index
    %22 = vector.load %arg4[%c0_8, %c0_9] : memref<1x128xf32, #tpu.memory_space<vmem>>, vector<1x128xf32>
    %23 = vector.broadcast %22 : vector<1x128xf32> to vector<16x128xf32>
    %24 = arith.mulf %21, %23 : vector<16x128xf32>
    %cst_10 = arith.constant dense<0.000000e+00> : vector<16xf32>
    %25 = vector.multi_reduction <add>, %24, %cst_10 [1] : vector<16x128xf32> to vector<16xf32>
    %26 = vector.shape_cast %25 : vector<16xf32> to vector<16x1xf32>
    %c0_11 = arith.constant 0 : index
    %c0_12 = arith.constant 0 : index
    %27 = vector.load %arg5[%c0_11, %c0_12] : memref<1x1xf32, #tpu.memory_space<vmem>>, vector<1x1xf32>
    %28 = vector.broadcast %27 : vector<1x1xf32> to vector<16x1xf32>
    %29 = arith.addf %26, %28 : vector<16x1xf32>
    %c0_13 = arith.constant 0 : index
    %c0_14 = arith.constant 0 : index
    %30 = vector.load %arg6[%c0_13, %c0_14] : memref<16x1xf32, #tpu.memory_space<vmem>>, vector<16x1xf32>
    tpu.vector_store %arg6[%c0_13, %c0_14], %29 {strides = array<i32>} : memref<16x1xf32, #tpu.memory_space<vmem>>, vector<16x1xf32>,
    return
  }
  func.func @transform_0(%arg0: i32) -> (i32, i32) {
    %c0_i32 = arith.constant 0 : i32
    %c0_i32_0 = arith.constant 0 : i32
    return %arg0, %c0_i32 : i32, i32
  }
  func.func @transform_1(%arg0: i32) -> (i32, i32) {
    %c0_i32 = arith.constant 0 : i32
    %c0_i32_0 = arith.constant 0 : i32
    %c0_i32_1 = arith.constant 0 : i32
    return %c0_i32, %c0_i32_0 : i32, i32
  }
  func.func @transform_2(%arg0: i32) -> (i32, i32) {
    %c0_i32 = arith.constant 0 : i32
    %c0_i32_0 = arith.constant 0 : i32
    %c0_i32_1 = arith.constant 0 : i32
    return %c0_i32, %c0_i32_0 : i32, i32
  }
  func.func @transform_3(%arg0: i32) -> (i32, i32) {
    %c0_i32 = arith.constant 0 : i32
    %c0_i32_0 = arith.constant 0 : i32
    %c0_i32_1 = arith.constant 0 : i32
    return %c0_i32, %c0_i32_0 : i32, i32
  }
  func.func @transform_4(%arg0: i32) -> (i32, i32) {
    %c0_i32 = arith.constant 0 : i32
    %c0_i32_0 = arith.constant 0 : i32
    %c0_i32_1 = arith.constant 0 : i32
    return %c0_i32, %c0_i32_0 : i32, i32
  }
  func.func @transform_5(%arg0: i32) -> (i32, i32) {
    %c0_i32 = arith.constant 0 : i32
    %c0_i32_0 = arith.constant 0 : i32
    return %arg0, %c0_i32 : i32, i32
  }
}

</mosaic_0001>

<llo_original>
// kernel: intro1dcnn_forward.1
$region0: #{intro1dcnn_forward.1}
  #allocation0 [shape = 'u32[]', space=smem, size = 0x4, offset = 0x4, fixed_abs, tag = 'smem constant byte address 0x4 - core index']
  #allocation1 [shape = 'u32[144,128]{1,0:T(1,128)}', space=vmem, size = 0x12000, scoped, tag = 'internal scratch']
  #allocation2 [shape = 'f32[1,1]{1,0:T(1,128)S(1)}', space=vmem, size = 0x200, scoped, tag = 'scoped memory for intro1dcnn_forward.1']
  %s0 = inlined_call_operand.vmem [shape: bf16[256,512], index: 0, kind: input, shape index: {}]
  %s1 = inlined_call_operand.vmem [shape: bf16[512,384], index: 1, kind: input, shape index: {}]
  %s2 = inlined_call_operand.vmem [shape: f32[1,128], index: 2, kind: input, shape index: {}]
  %s3 = inlined_call_operand.vmem [shape: f32[1,128], index: 3, kind: input, shape index: {}]
  %s4 = inlined_call_operand.<no memory space> [shape: f32[1,1], index: 4, kind: input, shape index: {}]
  %s5 = inlined_call_operand.vmem [shape: f32[16,1], index: 5, kind: output, shape index: {}]
  %s6 = sld [smem:[#allocation0]]
  $region30: #{intro1dcnn_forward.1} parent=0
    _
  %s8 = ssub.s32 1, %s6
  %s9 = scalar_select 0, %s8, %s6
  %v10 = vstv %s4
  %11 = vst [vmem:[#allocation2] sm:$0x1] %v10
  // Predicated region
  $region2: #{intro1dcnn_forward.1} parent=0 // pred_check
    _
  $region3: #{intro1dcnn_forward.1} parent=0 // pred_check_branch
    %13 = sbr.rel (0) target = $region5
  $region4: #{intro1dcnn_forward.1} parent=0 // pred_region
    _
  $region5: #{intro1dcnn_forward.1} parent=0 // pred_fallthru
    _
  // Predicated region
  $region6: #{intro1dcnn_forward.1} parent=0 // pred_check
    _
  $region7: #{intro1dcnn_forward.1} parent=0 // pred_check_branch
    %15 = sbr.rel (0) target = $region9
  $region8: #{intro1dcnn_forward.1} parent=0 // pred_region
    _
  $region9: #{intro1dcnn_forward.1} parent=0 // pred_fallthru
    _
  // Predicated region
  $region10: #{intro1dcnn_forward.1} parent=0 // pred_check
    _
  $region11: #{intro1dcnn_forward.1} parent=0 // pred_check_branch
    %17 = sbr.rel (0) target = $region13
  $region12: #{intro1dcnn_forward.1} parent=0 // pred_region
    _
  $region13: #{intro1dcnn_forward.1} parent=0 // pred_fallthru
    _
  // Predicated region
  $region14: #{intro1dcnn_forward.1} parent=0 // pred_check
    _
  $region15: #{intro1dcnn_forward.1} parent=0 // pred_check_branch
    %19 = sbr.rel (0) target = $region17
  $region16: #{intro1dcnn_forward.1} parent=0 // pred_region
    _
  $region17: #{intro1dcnn_forward.1} parent=0 // pred_fallthru
    _
  // Predicated region
  $region18: #{intro1dcnn_forward.1} parent=0 // pred_check
    _
  $region19: #{intro1dcnn_forward.1} parent=0 // pred_check_branch
    %21 = sbr.rel (0) target = $region21
  $region20: #{intro1dcnn_forward.1} parent=0 // pred_region
    _
  $region21: #{intro1dcnn_forward.1} parent=0 // pred_fallthru
    _
  %v23 = vld [vmem:[%s0] sm:$0xff]
  %v24 = vld [vmem:[%s0 + $0x8] sm:$0xff]
  %v25 = vld [vmem:[%s0 + $0x10] sm:$0xff]
  %v26 = vld [vmem:[%s0 + $0x18] sm:$0xff]
  %v27 = vld [vmem:[%s0 + $0x20] sm:$0xff]
  %v28 = vld [vmem:[%s0 + $0x28] sm:$0xff]
  %v29 = vld [vmem:[%s0 + $0x30] sm:$0xff]
  %v30 = vld [vmem:[%s0 + $0x38] sm:$0xff]
  %v31 = vld [vmem:[%s0 + $0x40] sm:$0xff]
  %v32 = vld [vmem:[%s0 + $0x48] sm:$0xff]
  %v33 = vld [vmem:[%s0 + $0x50] sm:$0xff]
  %v34 = vld [vmem:[%s0 + $0x58] sm:$0xff]
  %v35 = vld [vmem:[%s0 + $0x60] sm:$0xff]
  %v36 = vld [vmem:[%s0 + $0x68] sm:$0xff]
  %v37 = vld [vmem:[%s0 + $0x70] sm:$0xff]
  %v38 = vld [vmem:[%s0 + $0x78] sm:$0xff]
  %v39 = vld [vmem:[%s0 + $0x80] sm:$0xff]
  %v40 = vld [vmem:[%s0 + $0x88] sm:$0xff]
  %v41 = vld [vmem:[%s0 + $0x90] sm:$0xff]
  %v42 = vld [vmem:[%s0 + $0x98] sm:$0xff]
  %v43 = vld [vmem:[%s0 + $0xa0] sm:$0xff]
  %v44 = vld [vmem:[%s0 + $0xa8] sm:$0xff]
  %v45 = vld [vmem:[%s0 + $0xb0] sm:$0xff]
  %v46 = vld [vmem:[%s0 + $0xb8] sm:$0xff]
  %v47 = vld [vmem:[%s0 + $0xc0] sm:$0xff]
  %v48 = vld [vmem:[%s0 + $0xc8] sm:$0xff]
  %v49 = vld [vmem:[%s0 + $0xd0] sm:$0xff]
  %v50 = vld [vmem:[%s0 + $0xd8] sm:$0xff]
  %v51 = vld [vmem:[%s0 + $0xe0] sm:$0xff]
  %v52 = vld [vmem:[%s0 + $0xe8] sm:$0xff]
  %v53 = vld [vmem:[%s0 + $0xf0] sm:$0xff]
  %v54 = vld [vmem:[%s0 + $0xf8] sm:$0xff]
  %v55 = vld [vmem:[%s0 + $0x100] sm:$0xff]
  %v56 = vld [vmem:[%s0 + $0x108] sm:$0xff]
  %v57 = vld [vmem:[%s0 + $0x110] sm:$0xff]
  %v58 = vld [vmem:[%s0 + $0x118] sm:$0xff]
  %v59 = vld [vmem:[%s0 + $0x120] sm:$0xff]
  %v60 = vld [vmem:[%s0 + $0x128] sm:$0xff]
  %v61 = vld [vmem:[%s0 + $0x130] sm:$0xff]
  %v62 = vld [vmem:[%s0 + $0x138] sm:$0xff]
  %v63 = vld [vmem:[%s0 + $0x140] sm:$0xff]
  %v64 = vld [vmem:[%s0 + $0x148] sm:$0xff]
  %v65 = vld [vmem:[%s0 + $0x150] sm:$0xff]
  %v66 = vld [vmem:[%s0 + $0x158] sm:$0xff]
  %v67 = vld [vmem:[%s0 + $0x160] sm:$0xff]
  %v68 = vld [vmem:[%s0 + $0x168] sm:$0xff]
  %v69 = vld [vmem:[%s0 + $0x170] sm:$0xff]
  %v70 = vld [vmem:[%s0 + $0x178] sm:$0xff]
  %v71 = vld [vmem:[%s0 + $0x180] sm:$0xff]
  %v72 = vld [vmem:[%s0 + $0x188] sm:$0xff]
  %v73 = vld [vmem:[%s0 + $0x190] sm:$0xff]
  %v74 = vld [vmem:[%s0 + $0x198] sm:$0xff]
  %v75 = vld [vmem:[%s0 + $0x1a0] sm:$0xff]
  %v76 = vld [vmem:[%s0 + $0x1a8] sm:$0xff]
  %v77 = vld [vmem:[%s0 + $0x1b0] sm:$0xff]
  %v78 = vld [vmem:[%s0 + $0x1b8] sm:$0xff]
  %v79 = vld [vmem:[%s0 + $0x1c0] sm:$0xff]
  %v80 = vld [vmem:[%s0 + $0x1c8] sm:$0xff]
  %v81 = vld [vmem:[%s0 + $0x1d0] sm:$0xff]
  %v82 = vld [vmem:[%s0 + $0x1d8] sm:$0xff]
  %v83 = vld [vmem:[%s0 + $0x1e0] sm:$0xff]
  %v84 = vld [vmem:[%s0 + $0x1e8] sm:$0xff]
  %v85 = vld [vmem:[%s0 + $0x1f0] sm:$0xff]
  %v86 = vld [vmem:[%s0 + $0x1f8] sm:$0xff]
  %v87 = vld [vmem:[%s1] sm:$0xff]
  %v88 = vld [vmem:[%s1 + $0x8] sm:$0xf]
  %v89 = vld [vmem:[%s1 + $0xc] sm:$0xff]
  %v90 = vld [vmem:[%s1 + $0x14] sm:$0xf]
  %v91 = vld [vmem:[%s1 + $0x18] sm:$0xff]
  %v92 = vld [vmem:[%s1 + $0x20] sm:$0xf]
  %v93 = vld [vmem:[%s1 + $0x24] sm:$0xff]
  %v94 = vld [vmem:[%s1 + $0x2c] sm:$0xf]
  %v95 = vld [vmem:[%s1 + $0x30] sm:$0xff]
  %v96 = vld [vmem:[%s1 + $0x38] sm:$0xf]
  %v97 = vld [vmem:[%s1 + $0x3c] sm:$0xff]
  %v98 = vld [vmem:[%s1 + $0x44] sm:$0xf]
  %v99 = vld [vmem:[%s1 + $0x48] sm:$0xff]
  %v100 = vld [vmem:[%s1 + $0x50] sm:$0xf]
  %v101 = vld [vmem:[%s1 + $0x54] sm:$0xff]
  %v102 = vld [vmem:[%s1 + $0x5c] sm:$0xf]
  %v103 = vld [vmem:[%s1 + $0x60] sm:$0xff]
  %v104 = vld [vmem:[%s1 + $0x68] sm:$0xf]
  %v105 = vld [vmem:[%s1 + $0x6c] sm:$0xff]
  %v106 = vld [vmem:[%s1 + $0x74] sm:$0xf]
  %v107 = vld [vmem:[%s1 + $0x78] sm:$0xff]
  %v108 = vld [vmem:[%s1 + $0x80] sm:$0xf]
  %v109 = vld [vmem:[%s1 + $0x84] sm:$0xff]
  %v110 = vld [vmem:[%s1 + $0x8c] sm:$0xf]
  %v111 = vld [vmem:[%s1 + $0x90] sm:$0xff]
  %v112 = vld [vmem:[%s1 + $0x98] sm:$0xf]
  %v113 = vld [vmem:[%s1 + $0x9c] sm:$0xff]
  %v114 = vld [vmem:[%s1 + $0xa4] sm:$0xf]
  %v115 = vld [vmem:[%s1 + $0xa8] sm:$0xff]
  %v116 = vld [vmem:[%s1 + $0xb0] sm:$0xf]
  %v117 = vld [vmem:[%s1 + $0xb4] sm:$0xff]
  %v118 = vld [vmem:[%s1 + $0xbc] sm:$0xf]
  %v119 = vld [vmem:[%s1 + $0xc0] sm:$0xff]
  %v120 = vld [vmem:[%s1 + $0xc8] sm:$0xf]
  %v121 = vld [vmem:[%s1 + $0xcc] sm:$0xff]
  %v122 = vld [vmem:[%s1 + $0xd4] sm:$0xf]
  %v123 = vld [vmem:[%s1 + $0xd8] sm:$0xff]
  %v124 = vld [vmem:[%s1 + $0xe0] sm:$0xf]
  %v125 = vld [vmem:[%s1 + $0xe4] sm:$0xff]
  %v126 = vld [vmem:[%s1 + $0xec] sm:$0xf]
  %v127 = vld [vmem:[%s1 + $0xf0] sm:$0xff]
  %v128 = vld [vmem:[%s1 + $0xf8] sm:$0xf]
  %v129 = vld [vmem:[%s1 + $0xfc] sm:$0xff]
  %v130 = vld [vmem:[%s1 + $0x104] sm:$0xf]
  %v131 = vld [vmem:[%s1 + $0x108] sm:$0xff]
  %v132 = vld [vmem:[%s1 + $0x110] sm:$0xf]
  %v133 = vld [vmem:[%s1 + $0x114] sm:$0xff]
  %v134 = vld [vmem:[%s1 + $0x11c] sm:$0xf]
  %v135 = vld [vmem:[%s1 + $0x120] sm:$0xff]
  %v136 = vld [vmem:[%s1 + $0x128] sm:$0xf]
  %v137 = vld [vmem:[%s1 + $0x12c] sm:$0xff]
  %v138 = vld [vmem:[%s1 + $0x134] sm:$0xf]
  %v139 = vld [vmem:[%s1 + $0x138] sm:$0xff]
  %v140 = vld [vmem:[%s1 + $0x140] sm:$0xf]
  %v141 = vld [vmem:[%s1 + $0x144] sm:$0xff]
  %v142 = vld [vmem:[%s1 + $0x14c] sm:$0xf]
  %v143 = vld [vmem:[%s1 + $0x150] sm:$0xff]
  %v144 = vld [vmem:[%s1 + $0x158] sm:$0xf]
  %v145 = vld [vmem:[%s1 + $0x15c] sm:$0xff]
  %v146 = vld [vmem:[%s1 + $0x164] sm:$0xf]
  %v147 = vld [vmem:[%s1 + $0x168] sm:$0xff]
  %v148 = vld [vmem:[%s1 + $0x170] sm:$0xf]
  %v149 = vld [vmem:[%s1 + $0x174] sm:$0xff]
  %v150 = vld [vmem:[%s1 + $0x17c] sm:$0xf]
  %v151 = vld [vmem:[%s1 + $0x180] sm:$0xff]
  %v152 = vld [vmem:[%s1 + $0x188] sm:$0xf]
  %v153 = vld [vmem:[%s1 + $0x18c] sm:$0xff]
  %v154 = vld [vmem:[%s1 + $0x194] sm:$0xf]
  %v155 = vld [vmem:[%s1 + $0x198] sm:$0xff]
  %v156 = vld [vmem:[%s1 + $0x1a0] sm:$0xf]
  %v157 = vld [vmem:[%s1 + $0x1a4] sm:$0xff]
  %v158 = vld [vmem:[%s1 + $0x1ac] sm:$0xf]
  %v159 = vld [vmem:[%s1 + $0x1b0] sm:$0xff]
  %v160 = vld [vmem:[%s1 + $0x1b8] sm:$0xf]
  %v161 = vld [vmem:[%s1 + $0x1bc] sm:$0xff]
  %v162 = vld [vmem:[%s1 + $0x1c4] sm:$0xf]
  %v163 = vld [vmem:[%s1 + $0x1c8] sm:$0xff]
  %v164 = vld [vmem:[%s1 + $0x1d0] sm:$0xf]
  %v165 = vld [vmem:[%s1 + $0x1d4] sm:$0xff]
  %v166 = vld [vmem:[%s1 + $0x1dc] sm:$0xf]
  %v167 = vld [vmem:[%s1 + $0x1e0] sm:$0xff]
  %v168 = vld [vmem:[%s1 + $0x1e8] sm:$0xf]
  %v169 = vld [vmem:[%s1 + $0x1ec] sm:$0xff]
  %v170 = vld [vmem:[%s1 + $0x1f4] sm:$0xf]
  %v171 = vld [vmem:[%s1 + $0x1f8] sm:$0xff]
  %v172 = vld [vmem:[%s1 + $0x200] sm:$0xf]
  %v173 = vld [vmem:[%s1 + $0x204] sm:$0xff]
  %v174 = vld [vmem:[%s1 + $0x20c] sm:$0xf]
  %v175 = vld [vmem:[%s1 + $0x210] sm:$0xff]
  %v176 = vld [vmem:[%s1 + $0x218] sm:$0xf]
  %v177 = vld [vmem:[%s1 + $0x21c] sm:$0xff]
  %v178 = vld [vmem:[%s1 + $0x224] sm:$0xf]
  %v179 = vld [vmem:[%s1 + $0x228] sm:$0xff]
  %v180 = vld [vmem:[%s1 + $0x230] sm:$0xf]
  %v181 = vld [vmem:[%s1 + $0x234] sm:$0xff]
  %v182 = vld [vmem:[%s1 + $0x23c] sm:$0xf]
  %v183 = vld [vmem:[%s1 + $0x240] sm:$0xff]
  %v184 = vld [vmem:[%s1 + $0x248] sm:$0xf]
  %v185 = vld [vmem:[%s1 + $0x24c] sm:$0xff]
  %v186 = vld [vmem:[%s1 + $0x254] sm:$0xf]
  %v187 = vld [vmem:[%s1 + $0x258] sm:$0xff]
  %v188 = vld [vmem:[%s1 + $0x260] sm:$0xf]
  %v189 = vld [vmem:[%s1 + $0x264] sm:$0xff]
  %v190 = vld [vmem:[%s1 + $0x26c] sm:$0xf]
  %v191 = vld [vmem:[%s1 + $0x270] sm:$0xff]
  %v192 = vld [vmem:[%s1 + $0x278] sm:$0xf]
  %v193 = vld [vmem:[%s1 + $0x27c] sm:$0xff]
  %v194 = vld [vmem:[%s1 + $0x284] sm:$0xf]
  %v195 = vld [vmem:[%s1 + $0x288] sm:$0xff]
  %v196 = vld [vmem:[%s1 + $0x290] sm:$0xf]
  %v197 = vld [vmem:[%s1 + $0x294] sm:$0xff]
  %v198 = vld [vmem:[%s1 + $0x29c] sm:$0xf]
  %v199 = vld [vmem:[%s1 + $0x2a0] sm:$0xff]
  %v200 = vld [vmem:[%s1 + $0x2a8] sm:$0xf]
  %v201 = vld [vmem:[%s1 + $0x2ac] sm:$0xff]
  %v202 = vld [vmem:[%s1 + $0x2b4] sm:$0xf]
  %v203 = vld [vmem:[%s1 + $0x2b8] sm:$0xff]
  %v204 = vld [vmem:[%s1 + $0x2c0] sm:$0xf]
  %v205 = vld [vmem:[%s1 + $0x2c4] sm:$0xff]
  %v206 = vld [vmem:[%s1 + $0x2cc] sm:$0xf]
  %v207 = vld [vmem:[%s1 + $0x2d0] sm:$0xff]
  %v208 = vld [vmem:[%s1 + $0x2d8] sm:$0xf]
  %v209 = vld [vmem:[%s1 + $0x2dc] sm:$0xff]
  %v210 = vld [vmem:[%s1 + $0x2e4] sm:$0xf]
  %v211 = vld [vmem:[%s1 + $0x2e8] sm:$0xff]
  %v212 = vld [vmem:[%s1 + $0x2f0] sm:$0xf]
  %v213 = vld [vmem:[%s1 + $0x2f4] sm:$0xff]
  %v214 = vld [vmem:[%s1 + $0x2fc] sm:$0xf]
  %v279 = vunpack.c.l.b16 %v23
  %v280 = vunpack.c.h.b16 %v23
  %v281 = vunpack.c.l.b16 %v24
  %v282 = vunpack.c.h.b16 %v24
  %v283 = vunpack.c.l.b16 %v25
  %v284 = vunpack.c.h.b16 %v25
  %v285 = vunpack.c.l.b16 %v26
  %v286 = vunpack.c.h.b16 %v26
  %v287 = vunpack.c.l.b16 %v27
  %v288 = vunpack.c.h.b16 %v27
  %v289 = vunpack.c.l.b16 %v28
  %v290 = vunpack.c.h.b16 %v28
  %v291 = vunpack.c.l.b16 %v29
  %v292 = vunpack.c.h.b16 %v29
  %v293 = vunpack.c.l.b16 %v30
  %v294 = vunpack.c.h.b16 %v30
  %v295 = vunpack.c.l.b16 %v31
  %v296 = vunpack.c.h.b16 %v31
  %v297 = vunpack.c.l.b16 %v32
  %v298 = vunpack.c.h.b16 %v32
  %v299 = vunpack.c.l.b16 %v33
  %v300 = vunpack.c.h.b16 %v33
  %v301 = vunpack.c.l.b16 %v34
  %v302 = vunpack.c.h.b16 %v34
  %v303 = vunpack.c.l.b16 %v35
  %v304 = vunpack.c.h.b16 %v35
  %v305 = vunpack.c.l.b16 %v36
  %v306 = vunpack.c.h.b16 %v36
  %v307 = vunpack.c.l.b16 %v37
  %v308 = vunpack.c.h.b16 %v37
  %v309 = vunpack.c.l.b16 %v38
  %v310 = vunpack.c.h.b16 %v38
  %v311 = vunpack.c.l.b16 %v39
  %v312 = vunpack.c.h.b16 %v39
  %v313 = vunpack.c.l.b16 %v40
  %v314 = vunpack.c.h.b16 %v40
  %v315 = vunpack.c.l.b16 %v41
  %v316 = vunpack.c.h.b16 %v41
  %v317 = vunpack.c.l.b16 %v42
  %v318 = vunpack.c.h.b16 %v42
  %v319 = vunpack.c.l.b16 %v43
  %v320 = vunpack.c.h.b16 %v43
  %v321 = vunpack.c.l.b16 %v44
  %v322 = vunpack.c.h.b16 %v44
  %v323 = vunpack.c.l.b16 %v45
  %v324 = vunpack.c.h.b16 %v45
  %v325 = vunpack.c.l.b16 %v46
  %v326 = vunpack.c.h.b16 %v46
  %v327 = vunpack.c.l.b16 %v47
  %v328 = vunpack.c.h.b16 %v47
  %v329 = vunpack.c.l.b16 %v48
  %v330 = vunpack.c.h.b16 %v48
  %v331 = vunpack.c.l.b16 %v49
  %v332 = vunpack.c.h.b16 %v49
  %v333 = vunpack.c.l.b16 %v50
  %v334 = vunpack.c.h.b16 %v50
  %v335 = vunpack.c.l.b16 %v51
  %v336 = vunpack.c.h.b16 %v51
  %v337 = vunpack.c.l.b16 %v52
  %v338 = vunpack.c.h.b16 %v52
  %v339 = vunpack.c.l.b16 %v53
  %v340 = vunpack.c.h.b16 %v53
  %v341 = vunpack.c.l.b16 %v54
  %v342 = vunpack.c.h.b16 %v54
  %v343 = vunpack.c.l.b16 %v55
  %v344 = vunpack.c.h.b16 %v55
  %v345 = vunpack.c.l.b16 %v56
  %v346 = vunpack.c.h.b16 %v56
  %v347 = vunpack.c.l.b16 %v57
  %v348 = vunpack.c.h.b16 %v57
  %v349 = vunpack.c.l.b16 %v58
  %v350 = vunpack.c.h.b16 %v58
  %v351 = vunpack.c.l.b16 %v59
  %v352 = vunpack.c.h.b16 %v59
  %v353 = vunpack.c.l.b16 %v60
  %v354 = vunpack.c.h.b16 %v60
  %v355 = vunpack.c.l.b16 %v61
  %v356 = vunpack.c.h.b16 %v61
  %v357 = vunpack.c.l.b16 %v62
  %v358 = vunpack.c.h.b16 %v62
  %v359 = vunpack.c.l.b16 %v63
  %v360 = vunpack.c.h.b16 %v63
  %v361 = vunpack.c.l.b16 %v64
  %v362 = vunpack.c.h.b16 %v64
  %v363 = vunpack.c.l.b16 %v65
  %v364 = vunpack.c.h.b16 %v65
  %v365 = vunpack.c.l.b16 %v66
  %v366 = vunpack.c.h.b16 %v66
  %v367 = vunpack.c.l.b16 %v67
  %v368 = vunpack.c.h.b16 %v67
  %v369 = vunpack.c.l.b16 %v68
  %v370 = vunpack.c.h.b16 %v68
  %v371 = vunpack.c.l.b16 %v69
  %v372 = vunpack.c.h.b16 %v69
  %v373 = vunpack.c.l.b16 %v70
  %v374 = vunpack.c.h.b16 %v70
  %v375 = vunpack.c.l.b16 %v71
  %v376 = vunpack.c.h.b16 %v71
  %v377 = vunpack.c.l.b16 %v72
  %v378 = vunpack.c.h.b16 %v72
  %v379 = vunpack.c.l.b16 %v73
  %v380 = vunpack.c.h.b16 %v73
  %v381 = vunpack.c.l.b16 %v74
  %v382 = vunpack.c.h.b16 %v74
  %v383 = vunpack.c.l.b16 %v75
  %v384 = vunpack.c.h.b16 %v75
  %v385 = vunpack.c.l.b16 %v76
  %v386 = vunpack.c.h.b16 %v76
  %v387 = vunpack.c.l.b16 %v77
  %v388 = vunpack.c.h.b16 %v77
  %v389 = vunpack.c.l.b16 %v78
  %v390 = vunpack.c.h.b16 %v78
  %v391 = vunpack.c.l.b16 %v79
  %v392 = vunpack.c.h.b16 %v79
  %v393 = vunpack.c.l.b16 %v80
  %v394 = vunpack.c.h.b16 %v80
  %v395 = vunpack.c.l.b16 %v81
  %v396 = vunpack.c.h.b16 %v81
  %v397 = vunpack.c.l.b16 %v82
  %v398 = vunpack.c.h.b16 %v82
  %v399 = vunpack.c.l.b16 %v83
  %v400 = vunpack.c.h.b16 %v83
  %v401 = vunpack.c.l.b16 %v84
  %v402 = vunpack.c.h.b16 %v84
  %v403 = vunpack.c.l.b16 %v85
  %v404 = vunpack.c.h.b16 %v85
  %v405 = vunpack.c.l.b16 %v86
  %v406 = vunpack.c.h.b16 %v86
  %v407 = vpack.c.b16 %v283, %v279
  %v408 = vpack.c.b16 %v284, %v280
  %v409 = vpack.c.b16 %v285, %v281
  %v410 = vpack.c.b16 %v286, %v282
  %v411 = vpack.c.b16 %v291, %v287
  %v412 = vpack.c.b16 %v292, %v288
  %v413 = vpack.c.b16 %v293, %v289
  %v414 = vpack.c.b16 %v294, %v290
  %v415 = vpack.c.b16 %v299, %v295
  %v416 = vpack.c.b16 %v300, %v296
  %v417 = vpack.c.b16 %v301, %v297
  %v418 = vpack.c.b16 %v302, %v298
  %v419 = vpack.c.b16 %v307, %v303
  %v420 = vpack.c.b16 %v308, %v304
  %v421 = vpack.c.b16 %v309, %v305
  %v422 = vpack.c.b16 %v310, %v306
  %v423 = vpack.c.b16 %v315, %v311
  %v424 = vpack.c.b16 %v316, %v312
  %v425 = vpack.c.b16 %v317, %v313
  %v426 = vpack.c.b16 %v318, %v314
  %v427 = vpack.c.b16 %v323, %v319
  %v428 = vpack.c.b16 %v324, %v320
  %v429 = vpack.c.b16 %v325, %v321
  %v430 = vpack.c.b16 %v326, %v322
  %v431 = vpack.c.b16 %v331, %v327
  %v432 = vpack.c.b16 %v332, %v328
  %v433 = vpack.c.b16 %v333, %v329
  %v434 = vpack.c.b16 %v334, %v330
  %v435 = vpack.c.b16 %v339, %v335
  %v436 = vpack.c.b16 %v340, %v336
  %v437 = vpack.c.b16 %v341, %v337
  %v438 = vpack.c.b16 %v342, %v338
  %v439 = vpack.c.b16 %v347, %v343
  %v440 = vpack.c.b16 %v348, %v344
  %v441 = vpack.c.b16 %v349, %v345
  %v442 = vpack.c.b16 %v350, %v346
  %v443 = vpack.c.b16 %v355, %v351
  %v444 = vpack.c.b16 %v356, %v352
  %v445 = vpack.c.b16 %v357, %v353
  %v446 = vpack.c.b16 %v358, %v354
  %v447 = vpack.c.b16 %v363, %v359
  %v448 = vpack.c.b16 %v364, %v360
  %v449 = vpack.c.b16 %v365, %v361
  %v450 = vpack.c.b16 %v366, %v362
  %v451 = vpack.c.b16 %v371, %v367
  %v452 = vpack.c.b16 %v372, %v368
  %v453 = vpack.c.b16 %v373, %v369
  %v454 = vpack.c.b16 %v374, %v370
  %v455 = vpack.c.b16 %v379, %v375
  %v456 = vpack.c.b16 %v380, %v376
  %v457 = vpack.c.b16 %v381, %v377
  %v458 = vpack.c.b16 %v382, %v378
  %v459 = vpack.c.b16 %v387, %v383
  %v460 = vpack.c.b16 %v388, %v384
  %v461 = vpack.c.b16 %v389, %v385
  %v462 = vpack.c.b16 %v390, %v386
  %v463 = vpack.c.b16 %v395, %v391
  %v464 = vpack.c.b16 %v396, %v392
  %v465 = vpack.c.b16 %v397, %v393
  %v466 = vpack.c.b16 %v398, %v394
  %v467 = vpack.c.b16 %v403, %v399
  %v468 = vpack.c.b16 %v404, %v400
  %v469 = vpack.c.b16 %v405, %v401
  %v470 = vpack.c.b16 %v406, %v402
  %v663 = vunpack.c.l.b16 %v87
  %v664 = vunpack.c.h.b16 %v87
  %v665 = vunpack.c.l.b16 %v88
  %v666 = vunpack.c.l.b16 %v89
  %v667 = vunpack.c.h.b16 %v89
  %v668 = vunpack.c.l.b16 %v90
  %v669 = vunpack.c.l.b16 %v91
  %v670 = vunpack.c.h.b16 %v91
  %v671 = vunpack.c.l.b16 %v92
  %v672 = vunpack.c.l.b16 %v93
  %v673 = vunpack.c.h.b16 %v93
  %v674 = vunpack.c.l.b16 %v94
  %v675 = vunpack.c.l.b16 %v95
  %v676 = vunpack.c.h.b16 %v95
  %v677 = vunpack.c.l.b16 %v96
  %v678 = vunpack.c.l.b16 %v97
  %v679 = vunpack.c.h.b16 %v97
  %v680 = vunpack.c.l.b16 %v98
  %v681 = vunpack.c.l.b16 %v99
  %v682 = vunpack.c.h.b16 %v99
  %v683 = vunpack.c.l.b16 %v100
  %v684 = vunpack.c.l.b16 %v101
  %v685 = vunpack.c.h.b16 %v101
  %v686 = vunpack.c.l.b16 %v102
  %v687 = vunpack.c.l.b16 %v103
  %v688 = vunpack.c.h.b16 %v103
  %v689 = vunpack.c.l.b16 %v104
  %v690 = vunpack.c.l.b16 %v105
  %v691 = vunpack.c.h.b16 %v105
  %v692 = vunpack.c.l.b16 %v106
  %v693 = vunpack.c.l.b16 %v107
  %v694 = vunpack.c.h.b16 %v107
  %v695 = vunpack.c.l.b16 %v108
  %v696 = vunpack.c.l.b16 %v109
  %v697 = vunpack.c.h.b16 %v109
  %v698 = vunpack.c.l.b16 %v110
  %v699 = vunpack.c.l.b16 %v111
  %v700 = vunpack.c.h.b16 %v111
  %v701 = vunpack.c.l.b16 %v112
  %v702 = vunpack.c.l.b16 %v113
  %v703 = vunpack.c.h.b16 %v113
  %v704 = vunpack.c.l.b16 %v114
  %v705 = vunpack.c.l.b16 %v115
  %v706 = vunpack.c.h.b16 %v115
  %v707 = vunpack.c.l.b16 %v116
  %v708 = vunpack.c.l.b16 %v117
  %v709 = vunpack.c.h.b16 %v117
  %v710 = vunpack.c.l.b16 %v118
  %v711 = vunpack.c.l.b16 %v119
  %v712 = vunpack.c.h.b16 %v119
  %v713 = vunpack.c.l.b16 %v120
  %v714 = vunpack.c.l.b16 %v121
  %v715 = vunpack.c.h.b16 %v121
  %v716 = vunpack.c.l.b16 %v122
  %v717 = vunpack.c.l.b16 %v123
  %v718 = vunpack.c.h.b16 %v123
  %v719 = vunpack.c.l.b16 %v124
  %v720 = vunpack.c.l.b16 %v125
  %v721 = vunpack.c.h.b16 %v125
  %v722 = vunpack.c.l.b16 %v126
  %v723 = vunpack.c.l.b16 %v127
  %v724 = vunpack.c.h.b16 %v127
  %v725 = vunpack.c.l.b16 %v128
  %v726 = vunpack.c.l.b16 %v129
  %v727 = vunpack.c.h.b16 %v129
  %v728 = vunpack.c.l.b16 %v130
  %v729 = vunpack.c.l.b16 %v131
  %v730 = vunpack.c.h.b16 %v131
  %v731 = vunpack.c.l.b16 %v132
  %v732 = vunpack.c.l.b16 %v133
  %v733 = vunpack.c.h.b16 %v133
  %v734 = vunpack.c.l.b16 %v134
  %v735 = vunpack.c.l.b16 %v135
  %v736 = vunpack.c.h.b16 %v135
  %v737 = vunpack.c.l.b16 %v136
  %v738 = vunpack.c.l.b16 %v137
  %v739 = vunpack.c.h.b16 %v137
  %v740 = vunpack.c.l.b16 %v138
  %v741 = vunpack.c.l.b16 %v139
  %v742 = vunpack.c.h.b16 %v139
  %v743 = vunpack.c.l.b16 %v140
  %v744 = vunpack.c.l.b16 %v141
  %v745 = vunpack.c.h.b16 %v141
  %v746 = vunpack.c.l.b16 %v142
  %v747 = vunpack.c.l.b16 %v143
  %v748 = vunpack.c.h.b16 %v143
  %v749 = vunpack.c.l.b16 %v144
  %v750 = vunpack.c.l.b16 %v145
  %v751 = vunpack.c.h.b16 %v145
  %v752 = vunpack.c.l.b16 %v146
  %v753 = vunpack.c.l.b16 %v147
  %v754 = vunpack.c.h.b16 %v147
  %v755 = vunpack.c.l.b16 %v148
  %v756 = vunpack.c.l.b16 %v149
  %v757 = vunpack.c.h.b16 %v149
  %v758 = vunpack.c.l.b16 %v150
  %v759 = vunpack.c.l.b16 %v151
  %v760 = vunpack.c.h.b16 %v151
  %v761 = vunpack.c.l.b16 %v152
  %v762 = vunpack.c.l.b16 %v153
  %v763 = vunpack.c.h.b16 %v153
  %v764 = vunpack.c.l.b16 %v154
  %v765 = vunpack.c.l.b16 %v155
  %v766 = vunpack.c.h.b16 %v155
  %v767 = vunpack.c.l.b16 %v156
  %v768 = vunpack.c.l.b16 %v157
  %v769 = vunpack.c.h.b16 %v157
  %v770 = vunpack.c.l.b16 %v158
  %v771 = vunpack.c.l.b16 %v159
  %v772 = vunpack.c.h.b16 %v159
  %v773 = vunpack.c.l.b16 %v160
  %v774 = vunpack.c.l.b16 %v161
  %v775 = vunpack.c.h.b16 %v161
  %v776 = vunpack.c.l.b16 %v162
  %v777 = vunpack.c.l.b16 %v163
  %v778 = vunpack.c.h.b16 %v163
  %v779 = vunpack.c.l.b16 %v164
  %v780 = vunpack.c.l.b16 %v165
  %v781 = vunpack.c.h.b16 %v165
  %v782 = vunpack.c.l.b16 %v166
  %v783 = vunpack.c.l.b16 %v167
  %v784 = vunpack.c.h.b16 %v167
  %v785 = vunpack.c.l.b16 %v168
  %v786 = vunpack.c.l.b16 %v169
  %v787 = vunpack.c.h.b16 %v169
  %v788 = vunpack.c.l.b16 %v170
  %v789 = vunpack.c.l.b16 %v171
  %v790 = vunpack.c.h.b16 %v171
  %v791 = vunpack.c.l.b16 %v172
  %v792 = vunpack.c.l.b16 %v173
  %v793 = vunpack.c.h.b16 %v173
  %v794 = vunpack.c.l.b16 %v174
  %v795 = vunpack.c.l.b16 %v175
  %v796 = vunpack.c.h.b16 %v175
  %v797 = vunpack.c.l.b16 %v176
  %v798 = vunpack.c.l.b16 %v177
  %v799 = vunpack.c.h.b16 %v177
  %v800 = vunpack.c.l.b16 %v178
  %v801 = vunpack.c.l.b16 %v179
  %v802 = vunpack.c.h.b16 %v179
  %v803 = vunpack.c.l.b16 %v180
  %v804 = vunpack.c.l.b16 %v181
  %v805 = vunpack.c.h.b16 %v181
  %v806 = vunpack.c.l.b16 %v182
  %v807 = vunpack.c.l.b16 %v183
  %v808 = vunpack.c.h.b16 %v183
  %v809 = vunpack.c.l.b16 %v184
  %v810 = vunpack.c.l.b16 %v185
  %v811 = vunpack.c.h.b16 %v185
  %v812 = vunpack.c.l.b16 %v186
  %v813 = vunpack.c.l.b16 %v187
  %v814 = vunpack.c.h.b16 %v187
  %v815 = vunpack.c.l.b16 %v188
  %v816 = vunpack.c.l.b16 %v189
  %v817 = vunpack.c.h.b16 %v189
  %v818 = vunpack.c.l.b16 %v190
  %v819 = vunpack.c.l.b16 %v191
  %v820 = vunpack.c.h.b16 %v191
  %v821 = vunpack.c.l.b16 %v192
  %v822 = vunpack.c.l.b16 %v193
  %v823 = vunpack.c.h.b16 %v193
  %v824 = vunpack.c.l.b16 %v194
  %v825 = vunpack.c.l.b16 %v195
  %v826 = vunpack.c.h.b16 %v195
  %v827 = vunpack.c.l.b16 %v196
  %v828 = vunpack.c.l.b16 %v197
  %v829 = vunpack.c.h.b16 %v197
  %v830 = vunpack.c.l.b16 %v198
  %v831 = vunpack.c.l.b16 %v199
  %v832 = vunpack.c.h.b16 %v199
  %v833 = vunpack.c.l.b16 %v200
  %v834 = vunpack.c.l.b16 %v201
  %v835 = vunpack.c.h.b16 %v201
  %v836 = vunpack.c.l.b16 %v202
  %v837 = vunpack.c.l.b16 %v203
  %v838 = vunpack.c.h.b16 %v203
  %v839 = vunpack.c.l.b16 %v204
  %v840 = vunpack.c.l.b16 %v205
  %v841 = vunpack.c.h.b16 %v205
  %v842 = vunpack.c.l.b16 %v206
  %v843 = vunpack.c.l.b16 %v207
  %v844 = vunpack.c.h.b16 %v207
  %v845 = vunpack.c.l.b16 %v208
  %v846 = vunpack.c.l.b16 %v209
  %v847 = vunpack.c.h.b16 %v209
  %v848 = vunpack.c.l.b16 %v210
  %v849 = vunpack.c.l.b16 %v211
  %v850 = vunpack.c.h.b16 %v211
  %v851 = vunpack.c.l.b16 %v212
  %v852 = vunpack.c.l.b16 %v213
  %v853 = vunpack.c.h.b16 %v213
  %v854 = vunpack.c.l.b16 %v214
  %v855 = vpack.c.b16 %v666, %v663
  %v856 = vpack.c.b16 %v667, %v664
  %v857 = vpack.c.b16 %v668, %v665
  %v858 = vpack.c.b16 %v672, %v669
  %v859 = vpack.c.b16 %v673, %v670
  %v860 = vpack.c.b16 %v674, %v671
  %v861 = vpack.c.b16 %v678, %v675
  %v862 = vpack.c.b16 %v679, %v676
  %v863 = vpack.c.b16 %v680, %v677
  %v864 = vpack.c.b16 %v684, %v681
  %v865 = vpack.c.b16 %v685, %v682
  %v866 = vpack.c.b16 %v686, %v683
  %v867 = vpack.c.b16 %v690, %v687
  %v868 = vpack.c.b16 %v691, %v688
  %v869 = vpack.c.b16 %v692, %v689
  %v870 = vpack.c.b16 %v696, %v693
  %v871 = vpack.c.b16 %v697, %v694
  %v872 = vpack.c.b16 %v698, %v695
  %v873 = vpack.c.b16 %v702, %v699
  %v874 = vpack.c.b16 %v703, %v700
  %v875 = vpack.c.b16 %v704, %v701
  %v876 = vpack.c.b16 %v708, %v705
  %v877 = vpack.c.b16 %v709, %v706
  %v878 = vpack.c.b16 %v710, %v707
  %v879 = vpack.c.b16 %v714, %v711
  %v880 = vpack.c.b16 %v715, %v712
  %v881 = vpack.c.b16 %v716, %v713
  %v882 = vpack.c.b16 %v720, %v717
  %v883 = vpack.c.b16 %v721, %v718
  %v884 = vpack.c.b16 %v722, %v719
  %v885 = vpack.c.b16 %v726, %v723
  %v886 = vpack.c.b16 %v727, %v724
  %v887 = vpack.c.b16 %v728, %v725
  %v888 = vpack.c.b16 %v732, %v729
  %v889 = vpack.c.b16 %v733, %v730
  %v890 = vpack.c.b16 %v734, %v731
  %v891 = vpack.c.b16 %v738, %v735
  %v892 = vpack.c.b16 %v739, %v736
  %v893 = vpack.c.b16 %v740, %v737
  %v894 = vpack.c.b16 %v744, %v741
  %v895 = vpack.c.b16 %v745, %v742
  %v896 = vpack.c.b16 %v746, %v743
  %v897 = vpack.c.b16 %v750, %v747
  %v898 = vpack.c.b16 %v751, %v748
  %v899 = vpack.c.b16 %v752, %v749
  %v900 = vpack.c.b16 %v756, %v753
  %v901 = vpack.c.b16 %v757, %v754
  %v902 = vpack.c.b16 %v758, %v755
  %v903 = vpack.c.b16 %v762, %v759
  %v904 = vpack.c.b16 %v763, %v760
  %v905 = vpack.c.b16 %v764, %v761
  %v906 = vpack.c.b16 %v768, %v765
  %v907 = vpack.c.b16 %v769, %v766
  %v908 = vpack.c.b16 %v770, %v767
  %v909 = vpack.c.b16 %v774, %v771
  %v910 = vpack.c.b16 %v775, %v772
  %v911 = vpack.c.b16 %v776, %v773
  %v912 = vpack.c.b16 %v780, %v777
  %v913 = vpack.c.b16 %v781, %v778
  %v914 = vpack.c.b16 %v782, %v779
  %v915 = vpack.c.b16 %v786, %v783
  %v916 = vpack.c.b16 %v787, %v784
  %v917 = vpack.c.b16 %v788, %v785
  %v918 = vpack.c.b16 %v792, %v789
  %v919 = vpack.c.b16 %v793, %v790
  %v920 = vpack.c.b16 %v794, %v791
  %v921 = vpack.c.b16 %v798, %v795
  %v922 = vpack.c.b16 %v799, %v796
  %v923 = vpack.c.b16 %v800, %v797
  %v924 = vpack.c.b16 %v804, %v801
  %v925 = vpack.c.b16 %v805, %v802
  %v926 = vpack.c.b16 %v806, %v803
  %v927 = vpack.c.b16 %v810, %v807
  %v928 = vpack.c.b16 %v811, %v808
  %v929 = vpack.c.b16 %v812, %v809
  %v930 = vpack.c.b16 %v816, %v813
  %v931 = vpack.c.b16 %v817, %v814
  %v932 = vpack.c.b16 %v818, %v815
  %v933 = vpack.c.b16 %v822, %v819
  %v934 = vpack.c.b16 %v823, %v820
  %v935 = vpack.c.b16 %v824, %v821
  %v936 = vpack.c.b16 %v828, %v825
  %v937 = vpack.c.b16 %v829, %v826
  %v938 = vpack.c.b16 %v830, %v827
  %v939 = vpack.c.b16 %v834, %v831
  %v940 = vpack.c.b16 %v835, %v832
  %v941 = vpack.c.b16 %v836, %v833
  %v942 = vpack.c.b16 %v840, %v837
  %v943 = vpack.c.b16 %v841, %v838
  %v944 = vpack.c.b16 %v842, %v839
  %v945 = vpack.c.b16 %v846, %v843
  %v946 = vpack.c.b16 %v847, %v844
  %v947 = vpack.c.b16 %v848, %v845
  %v948 = vpack.c.b16 %v852, %v849
  %v949 = vpack.c.b16 %v853, %v850
  %v950 = vpack.c.b16 %v854, %v851
  %1047 = vmatprep.subr.bf16.mxu0 %v856
  %1048 = vmatpush1.bf16.msra.mxu0 %v855
  %1049 = vmatprep.subr.bf16.mxu0 %v859
  %1050 = vmatpush1.bf16.msra.mxu0 %v858
  %1051 = vmatprep.subr.bf16.mxu0 %v862
  %1052 = vmatpush1.bf16.msra.mxu0 %v861
  %1053 = vmatprep.subr.bf16.mxu0 %v865
  %1054 = vmatpush1.bf16.msra.mxu0 %v864
  %1055 = vmatprep.subr.bf16.mxu0 %v868
  %1056 = vmatpush1.bf16.msra.mxu0 %v867
  %1057 = vmatprep.subr.bf16.mxu0 %v871
  %1058 = vmatpush1.bf16.msra.mxu0 %v870
  %1059 = vmatprep.subr.bf16.mxu0 %v874
  %1060 = vmatpush1.bf16.msra.mxu0 %v873
  %1061 = vmatprep.subr.bf16.mxu0 %v877
  %1062 = vmatpush1.bf16.msra.mxu0 %v876
  %1063 = vmatprep.subr.bf16.mxu0 %v880
  %1064 = vmatpush1.bf16.msra.mxu0 %v879
  %1065 = vmatprep.subr.bf16.mxu0 %v883
  %1066 = vmatpush1.bf16.msra.mxu0 %v882
  %1067 = vmatprep.subr.bf16.mxu0 %v886
  %1068 = vmatpush1.bf16.msra.mxu0 %v885
  %1069 = vmatprep.subr.bf16.mxu0 %v889
  %1070 = vmatpush1.bf16.msra.mxu0 %v888
  %1071 = vmatprep.subr.bf16.mxu0 %v892
  %1072 = vmatpush1.bf16.msra.mxu0 %v891
  %1073 = vmatprep.subr.bf16.mxu0 %v895
  %1074 = vmatpush1.bf16.msra.mxu0 %v894
  %1075 = vmatprep.subr.bf16.mxu0 %v898
  %1076 = vmatpush1.bf16.msra.mxu0 %v897
  %1077 = vmatprep.subr.bf16.mxu0 %v901
  %1078 = vmatpush1.bf16.msra.mxu0 %v900
  %1079 = vmatprep.mubr.bf16.mxu0 %v408
  %1080 = vmatmul.mubr.bf16.gmra.mrb[0].mxu0 %v407
  %v1081 = vpop.f32.mrb[0].mxu0
  %v1082 = vadd.f32 0.0, %v1081
  %v1083 = vpop.f32.mrb[0].mxu0
  %v1084 = vadd.f32 0.0, %v1083
  %v1085 = vpop.f32.mrb[0].mxu0
  %v1086 = vadd.f32 0.0, %v1085
  %v1087 = vpop.f32.mrb[0].mxu0
  %v1088 = vadd.f32 0.0, %v1087
  %1089 = vmatprep.mubr.bf16.mxu0 %v412
  %1090 = vmatmul.mubr.bf16.gmra.mrb[0].mxu0 %v411
  %v1091 = vpop.f32.mrb[0].mxu0
  %v1092 = vadd.f32 0.0, %v1091
  %v1093 = vpop.f32.mrb[0].mxu0
  %v1094 = vadd.f32 0.0, %v1093
  %v1095 = vpop.f32.mrb[0].mxu0
  %v1096 = vadd.f32 0.0, %v1095
  %v1097 = vpop.f32.mrb[0].mxu0
  %v1098 = vadd.f32 0.0, %v1097
  %1099 = vmatprep.mubr.bf16.mxu0 %v416
  %1100 = vmatmul.mubr.bf16.gmra.mrb[0].mxu0 %v415
  %v1101 = vpop.f32.mrb[0].mxu0
  %v1102 = vadd.f32 0.0, %v1101
  %v1103 = vpop.f32.mrb[0].mxu0
  %v1104 = vadd.f32 0.0, %v1103
  %v1105 = vpop.f32.mrb[0].mxu0
  %v1106 = vadd.f32 0.0, %v1105
  %v1107 = vpop.f32.mrb[0].mxu0
  %v1108 = vadd.f32 0.0, %v1107
  %1109 = vmatprep.mubr.bf16.mxu0 %v420
  %1110 = vmatmul.mubr.bf16.gmra.mrb[0].mxu0 %v419
  %v1111 = vpop.f32.mrb[0].mxu0
  %v1112 = vadd.f32 0.0, %v1111
  %v1113 = vpop.f32.mrb[0].mxu0
  %v1114 = vadd.f32 0.0, %v1113
  %v1115 = vpop.f32.mrb[0].mxu0
  %v1116 = vadd.f32 0.0, %v1115
  %v1117 = vpop.f32.mrb[0].mxu0
  %v1118 = vadd.f32 0.0, %v1117
  %1119 = vmatprep.mubr.bf16.mxu0 %v424
  %1120 = vmatmul.mubr.bf16.gmra.mrb[0].mxu0 %v423
  %v1121 = vpop.f32.mrb[0].mxu0
  %v1122 = vadd.f32 0.0, %v1121
  %v1123 = vpop.f32.mrb[0].mxu0
  %v1124 = vadd.f32 0.0, %v1123
  %v1125 = vpop.f32.mrb[0].mxu0
  %v1126 = vadd.f32 0.0, %v1125
  %v1127 = vpop.f32.mrb[0].mxu0
  %v1128 = vadd.f32 0.0, %v1127
  %1129 = vmatprep.mubr.bf16.mxu0 %v428
  %1130 = vmatmul.mubr.bf16.gmra.mrb[0].mxu0 %v427
  %v1131 = vpop.f32.mrb[0].mxu0
  %v1132 = vadd.f32 0.0, %v1131
  %v1133 = vpop.f32.mrb[0].mxu0
  %v1134 = vadd.f32 0.0, %v1133
  %v1135 = vpop.f32.mrb[0].mxu0
  %v1136 = vadd.f32 0.0, %v1135
  %v1137 = vpop.f32.mrb[0].mxu0
  %v1138 = vadd.f32 0.0, %v1137
  %1139 = vmatprep.mubr.bf16.mxu0 %v432
  %1140 = vmatmul.mubr.bf16.gmra.mrb[0].mxu0 %v431
  %v1141 = vpop.f32.mrb[0].mxu0
  %v1142 = vadd.f32 0.0, %v1141
  %v1143 = vpop.f32.mrb[0].mxu0
  %v1144 = vadd.f32 0.0, %v1143
  %v1145 = vpop.f32.mrb[0].mxu0
  %v1146 = vadd.f32 0.0, %v1145
  %v1147 = vpop.f32.mrb[0].mxu0
  %v1148 = vadd.f32 0.0, %v1147
  %1149 = vmatprep.mubr.bf16.mxu0 %v436
  %1150 = vmatmul.mubr.bf16.gmra.mrb[0].mxu0 %v435
  %v1151 = vpop.f32.mrb[0].mxu0
  %v1152 = vadd.f32 0.0, %v1151
  %v1153 = vpop.f32.mrb[0].mxu0
  %v1154 = vadd.f32 0.0, %v1153
  %v1155 = vpop.f32.mrb[0].mxu0
  %v1156 = vadd.f32 0.0, %v1155
  %v1157 = vpop.f32.mrb[0].mxu0
  %v1158 = vadd.f32 0.0, %v1157
  %1159 = vmatprep.mubr.bf16.mxu0 %v440
  %1160 = vmatmul.mubr.bf16.gmra.mrb[0].mxu0 %v439
  %v1161 = vpop.f32.mrb[0].mxu0
  %v1162 = vadd.f32 0.0, %v1161
  %v1163 = vpop.f32.mrb[0].mxu0
  %v1164 = vadd.f32 0.0, %v1163
  %v1165 = vpop.f32.mrb[0].mxu0
  %v1166 = vadd.f32 0.0, %v1165
  %v1167 = vpop.f32.mrb[0].mxu0
  %v1168 = vadd.f32 0.0, %v1167
  %1169 = vmatprep.mubr.bf16.mxu0 %v444
  %1170 = vmatmul.mubr.bf16.gmra.mrb[0].mxu0 %v443
  %v1171 = vpop.f32.mrb[0].mxu0
  %v1172 = vadd.f32 0.0, %v1171
  %v1173 = vpop.f32.mrb[0].mxu0
  %v1174 = vadd.f32 0.0, %v1173
  %v1175 = vpop.f32.mrb[0].mxu0
  %v1176 = vadd.f32 0.0, %v1175
  %v1177 = vpop.f32.mrb[0].mxu0
  %v1178 = vadd.f32 0.0, %v1177
  %1179 = vmatprep.mubr.bf16.mxu0 %v448
  %1180 = vmatmul.mubr.bf16.gmra.mrb[0].mxu0 %v447
  %v1181 = vpop.f32.mrb[0].mxu0
  %v1182 = vadd.f32 0.0, %v1181
  %v1183 = vpop.f32.mrb[0].mxu0
  %v1184 = vadd.f32 0.0, %v1183
  %v1185 = vpop.f32.mrb[0].mxu0
  %v1186 = vadd.f32 0.0, %v1185
  %v1187 = vpop.f32.mrb[0].mxu0
  %v1188 = vadd.f32 0.0, %v1187
  %1189 = vmatprep.mubr.bf16.mxu0 %v452
  %1190 = vmatmul.mubr.bf16.gmra.mrb[0].mxu0 %v451
  %v1191 = vpop.f32.mrb[0].mxu0
  %v1192 = vadd.f32 0.0, %v1191
  %v1193 = vpop.f32.mrb[0].mxu0
  %v1194 = vadd.f32 0.0, %v1193
  %v1195 = vpop.f32.mrb[0].mxu0
  %v1196 = vadd.f32 0.0, %v1195
  %v1197 = vpop.f32.mrb[0].mxu0
  %v1198 = vadd.f32 0.0, %v1197
  %1199 = vmatprep.mubr.bf16.mxu0 %v456
  %1200 = vmatmul.mubr.bf16.gmra.mrb[0].mxu0 %v455
  %v1201 = vpop.f32.mrb[0].mxu0
  %v1202 = vadd.f32 0.0, %v1201
  %v1203 = vpop.f32.mrb[0].mxu0
  %v1204 = vadd.f32 0.0, %v1203
  %v1205 = vpop.f32.mrb[0].mxu0
  %v1206 = vadd.f32 0.0, %v1205
  %v1207 = vpop.f32.mrb[0].mxu0
  %v1208 = vadd.f32 0.0, %v1207
  %1209 = vmatprep.mubr.bf16.mxu0 %v460
  %1210 = vmatmul.mubr.bf16.gmra.mrb[0].mxu0 %v459
  %v1211 = vpop.f32.mrb[0].mxu0
  %v1212 = vadd.f32 0.0, %v1211
  %v1213 = vpop.f32.mrb[0].mxu0
  %v1214 = vadd.f32 0.0, %v1213
  %v1215 = vpop.f32.mrb[0].mxu0
  %v1216 = vadd.f32 0.0, %v1215
  %v1217 = vpop.f32.mrb[0].mxu0
  %v1218 = vadd.f32 0.0, %v1217
  %1219 = vmatprep.mubr.bf16.mxu0 %v464
  %1220 = vmatmul.mubr.bf16.gmra.mrb[0].mxu0 %v463
  %v1221 = vpop.f32.mrb[0].mxu0
  %v1222 = vadd.f32 0.0, %v1221
  %v1223 = vpop.f32.mrb[0].mxu0
  %v1224 = vadd.f32 0.0, %v1223
  %v1225 = vpop.f32.mrb[0].mxu0
  %v1226 = vadd.f32 0.0, %v1225
  %v1227 = vpop.f32.mrb[0].mxu0
  %v1228 = vadd.f32 0.0, %v1227
  %1229 = vmatprep.mubr.bf16.mxu0 %v468
  %1230 = vmatmul.mubr.bf16.gmra.mrb[0].mxu0 %v467
  %v1231 = vpop.f32.mrb[0].mxu0
  %v1232 = vadd.f32 0.0, %v1231
  %v1233 = vpop.f32.mrb[0].mxu0
  %v1234 = vadd.f32 0.0, %v1233
  %v1235 = vpop.f32.mrb[0].mxu0
  %v1236 = vadd.f32 0.0, %v1235
  %v1237 = vpop.f32.mrb[0].mxu0
  %v1238 = vadd.f32 0.0, %v1237
  %1239 = vdwg.mxu0
  %1240 = vmatprep.subr.bf16.mxu0 %v904
  %1241 = vmatpush1.bf16.msra.mxu0 %v903
  %1242 = vmatprep.subr.bf16.mxu0 %v907
  %1243 = vmatpush1.bf16.msra.mxu0 %v906
  %1244 = vmatprep.subr.bf16.mxu0 %v910
  %1245 = vmatpush1.bf16.msra.mxu0 %v909
  %1246 = vmatprep.subr.bf16.mxu0 %v913
  %1247 = vmatpush1.bf16.msra.mxu0 %v912
  %1248 = vmatprep.subr.bf16.mxu0 %v916
  %1249 = vmatpush1.bf16.msra.mxu0 %v915
  %1250 = vmatprep.subr.bf16.mxu0 %v919
  %1251 = vmatpush1.bf16.msra.mxu0 %v918
  %1252 = vmatprep.subr.bf16.mxu0 %v922
  %1253 = vmatpush1.bf16.msra.mxu0 %v921
  %1254 = vmatprep.subr.bf16.mxu0 %v925
  %1255 = vmatpush1.bf16.msra.mxu0 %v924
  %1256 = vmatprep.subr.bf16.mxu0 %v928
  %1257 = vmatpush1.bf16.msra.mxu0 %v927
  %1258 = vmatprep.subr.bf16.mxu0 %v931
  %1259 = vmatpush1.bf16.msra.mxu0 %v930
  %1260 = vmatprep.subr.bf16.mxu0 %v934
  %1261 = vmatpush1.bf16.msra.mxu0 %v933
  %1262 = vmatprep.subr.bf16.mxu0 %v937
  %1263 = vmatpush1.bf16.msra.mxu0 %v936
  %1264 = vmatprep.subr.bf16.mxu0 %v940
  %1265 = vmatpush1.bf16.msra.mxu0 %v939
  %1266 = vmatprep.subr.bf16.mxu0 %v943
  %1267 = vmatpush1.bf16.msra.mxu0 %v942
  %1268 = vmatprep.subr.bf16.mxu0 %v946
  %1269 = vmatpush1.bf16.msra.mxu0 %v945
  %1270 = vmatprep.subr.bf16.mxu0 %v949
  %1271 = vmatpush1.bf16.msra.mxu0 %v948
  %1272 = vmatprep.mubr.bf16.mxu0 %v410
  %1273 = vmatmul.mubr.bf16.gmra.mrb[0].mxu0 %v409
  %v1274 = vpop.f32.mrb[0].mxu0
  %v1275 = vadd.f32 %v1082, %v1274
  %v1276 = vpop.f32.mrb[0].mxu0
  %v1277 = vadd.f32 %v1084, %v1276
  %v1278 = vpop.f32.mrb[0].mxu0
  %v1279 = vadd.f32 %v1086, %v1278
  %v1280 = vpop.f32.mrb[0].mxu0
  %v1281 = vadd.f32 %v1088, %v1280
  %1282 = vmatprep.mubr.bf16.mxu0 %v414
  %1283 = vmatmul.mubr.bf16.gmra.mrb[0].mxu0 %v413
  %v1284 = vpop.f32.mrb[0].mxu0
  %v1285 = vadd.f32 %v1092, %v1284
  %v1286 = vpop.f32.mrb[0].mxu0
  %v1287 = vadd.f32 %v1094, %v1286
  %v1288 = vpop.f32.mrb[0].mxu0
  %v1289 = vadd.f32 %v1096, %v1288
  %v1290 = vpop.f32.mrb[0].mxu0
  %v1291 = vadd.f32 %v1098, %v1290
  %1292 = vmatprep.mubr.bf16.mxu0 %v418
  %1293 = vmatmul.mubr.bf16.gmra.mrb[0].mxu0 %v417
  %v1294 = vpop.f32.mrb[0].mxu0
  %v1295 = vadd.f32 %v1102, %v1294
  %v1296 = vpop.f32.mrb[0].mxu0
  %v1297 = vadd.f32 %v1104, %v1296
  %v1298 = vpop.f32.mrb[0].mxu0
  %v1299 = vadd.f32 %v1106, %v1298
  %v1300 = vpop.f32.mrb[0].mxu0
  %v1301 = vadd.f32 %v1108, %v1300
  %1302 = vmatprep.mubr.bf16.mxu0 %v422
  %1303 = vmatmul.mubr.bf16.gmra.mrb[0].mxu0 %v421
  %v1304 = vpop.f32.mrb[0].mxu0
  %v1305 = vadd.f32 %v1112, %v1304
  %v1306 = vpop.f32.mrb[0].mxu0
  %v1307 = vadd.f32 %v1114, %v1306
  %v1308 = vpop.f32.mrb[0].mxu0
  %v1309 = vadd.f32 %v1116, %v1308
  %v1310 = vpop.f32.mrb[0].mxu0
  %v1311 = vadd.f32 %v1118, %v1310
  %1312 = vmatprep.mubr.bf16.mxu0 %v426
  %1313 = vmatmul.mubr.bf16.gmra.mrb[0].mxu0 %v425
  %v1314 = vpop.f32.mrb[0].mxu0
  %v1315 = vadd.f32 %v1122, %v1314
  %v1316 = vpop.f32.mrb[0].mxu0
  %v1317 = vadd.f32 %v1124, %v1316
  %v1318 = vpop.f32.mrb[0].mxu0
  %v1319 = vadd.f32 %v1126, %v1318
  %v1320 = vpop.f32.mrb[0].mxu0
  %v1321 = vadd.f32 %v1128, %v1320
  %1322 = vmatprep.mubr.bf16.mxu0 %v430
  %1323 = vmatmul.mubr.bf16.gmra.mrb[0].mxu0 %v429
  %v1324 = vpop.f32.mrb[0].mxu0
  %v1325 = vadd.f32 %v1132, %v1324
  %v1326 = vpop.f32.mrb[0].mxu0
  %v1327 = vadd.f32 %v1134, %v1326
  %v1328 = vpop.f32.mrb[0].mxu0
  %v1329 = vadd.f32 %v1136, %v1328
  %v1330 = vpop.f32.mrb[0].mxu0
  %v1331 = vadd.f32 %v1138, %v1330
  %1332 = vmatprep.mubr.bf16.mxu0 %v434
  %1333 = vmatmul.mubr.bf16.gmra.mrb[0].mxu0 %v433
  %v1334 = vpop.f32.mrb[0].mxu0
  %v1335 = vadd.f32 %v1142, %v1334
  %v1336 = vpop.f32.mrb[0].mxu0
  %v1337 = vadd.f32 %v1144, %v1336
  %v1338 = vpop.f32.mrb[0].mxu0
  %v1339 = vadd.f32 %v1146, %v1338
  %v1340 = vpop.f32.mrb[0].mxu0
  %v1341 = vadd.f32 %v1148, %v1340
  %1342 = vmatprep.mubr.bf16.mxu0 %v438
  %1343 = vmatmul.mubr.bf16.gmra.mrb[0].mxu0 %v437
  %v1344 = vpop.f32.mrb[0].mxu0
  %v1345 = vadd.f32 %v1152, %v1344
  %v1346 = vpop.f32.mrb[0].mxu0
  %v1347 = vadd.f32 %v1154, %v1346
  %v1348 = vpop.f32.mrb[0].mxu0
  %v1349 = vadd.f32 %v1156, %v1348
  %v1350 = vpop.f32.mrb[0].mxu0
  %v1351 = vadd.f32 %v1158, %v1350
  %1352 = vmatprep.mubr.bf16.mxu0 %v442
  %1353 = vmatmul.mubr.bf16.gmra.mrb[0].mxu0 %v441
  %v1354 = vpop.f32.mrb[0].mxu0
  %v1355 = vadd.f32 %v1162, %v1354
  %v1356 = vpop.f32.mrb[0].mxu0
  %v1357 = vadd.f32 %v1164, %v1356
  %v1358 = vpop.f32.mrb[0].mxu0
  %v1359 = vadd.f32 %v1166, %v1358
  %v1360 = vpop.f32.mrb[0].mxu0
  %v1361 = vadd.f32 %v1168, %v1360
  %1362 = vmatprep.mubr.bf16.mxu0 %v446
  %1363 = vmatmul.mubr.bf16.gmra.mrb[0].mxu0 %v445
  %v1364 = vpop.f32.mrb[0].mxu0
  %v1365 = vadd.f32 %v1172, %v1364
  %v1366 = vpop.f32.mrb[0].mxu0
  %v1367 = vadd.f32 %v1174, %v1366
  %v1368 = vpop.f32.mrb[0].mxu0
  %v1369 = vadd.f32 %v1176, %v1368
  %v1370 = vpop.f32.mrb[0].mxu0
  %v1371 = vadd.f32 %v1178, %v1370
  %1372 = vmatprep.mubr.bf16.mxu0 %v450
  %1373 = vmatmul.mubr.bf16.gmra.mrb[0].mxu0 %v449
  %v1374 = vpop.f32.mrb[0].mxu0
  %v1375 = vadd.f32 %v1182, %v1374
  %v1376 = vpop.f32.mrb[0].mxu0
  %v1377 = vadd.f32 %v1184, %v1376
  %v1378 = vpop.f32.mrb[0].mxu0
  %v1379 = vadd.f32 %v1186, %v1378
  %v1380 = vpop.f32.mrb[0].mxu0
  %v1381 = vadd.f32 %v1188, %v1380
  %1382 = vmatprep.mubr.bf16.mxu0 %v454
  %1383 = vmatmul.mubr.bf16.gmra.mrb[0].mxu0 %v453
  %v1384 = vpop.f32.mrb[0].mxu0
  %v1385 = vadd.f32 %v1192, %v1384
  %v1386 = vpop.f32.mrb[0].mxu0
  %v1387 = vadd.f32 %v1194, %v1386
  %v1388 = vpop.f32.mrb[0].mxu0
  %v1389 = vadd.f32 %v1196, %v1388
  %v1390 = vpop.f32.mrb[0].mxu0
  %v1391 = vadd.f32 %v1198, %v1390
  %1392 = vmatprep.mubr.bf16.mxu0 %v458
  %1393 = vmatmul.mubr.bf16.gmra.mrb[0].mxu0 %v457
  %v1394 = vpop.f32.mrb[0].mxu0
  %v1395 = vadd.f32 %v1202, %v1394
  %v1396 = vpop.f32.mrb[0].mxu0
  %v1397 = vadd.f32 %v1204, %v1396
  %v1398 = vpop.f32.mrb[0].mxu0
  %v1399 = vadd.f32 %v1206, %v1398
  %v1400 = vpop.f32.mrb[0].mxu0
  %v1401 = vadd.f32 %v1208, %v1400
  %1402 = vmatprep.mubr.bf16.mxu0 %v462
  %1403 = vmatmul.mubr.bf16.gmra.mrb[0].mxu0 %v461
  %v1404 = vpop.f32.mrb[0].mxu0
  %v1405 = vadd.f32 %v1212, %v1404
  %v1406 = vpop.f32.mrb[0].mxu0
  %v1407 = vadd.f32 %v1214, %v1406
  %v1408 = vpop.f32.mrb[0].mxu0
  %v1409 = vadd.f32 %v1216, %v1408
  %v1410 = vpop.f32.mrb[0].mxu0
  %v1411 = vadd.f32 %v1218, %v1410
  %1412 = vmatprep.mubr.bf16.mxu0 %v466
  %1413 = vmatmul.mubr.bf16.gmra.mrb[0].mxu0 %v465
  %v1414 = vpop.f32.mrb[0].mxu0
  %v1415 = vadd.f32 %v1222, %v1414
  %v1416 = vpop.f32.mrb[0].mxu0
  %v1417 = vadd.f32 %v1224, %v1416
  %v1418 = vpop.f32.mrb[0].mxu0
  %v1419 = vadd.f32 %v1226, %v1418
  %v1420 = vpop.f32.mrb[0].mxu0
  %v1421 = vadd.f32 %v1228, %v1420
  %1422 = vmatprep.mubr.bf16.mxu0 %v470
  %1423 = vmatmul.mubr.bf16.gmra.mrb[0].mxu0 %v469
  %v1424 = vpop.f32.mrb[0].mxu0
  %v1425 = vadd.f32 %v1232, %v1424
  %v1426 = vpop.f32.mrb[0].mxu0
  %v1427 = vadd.f32 %v1234, %v1426
  %v1428 = vpop.f32.mrb[0].mxu0
  %v1429 = vadd.f32 %v1236, %v1428
  %v1430 = vpop.f32.mrb[0].mxu0
  %v1431 = vadd.f32 %v1238, %v1430
  %1432 = vdwg.mxu0
  %1433 = vmatprep.subr.bf16.mxu0 0
  %1434 = vmatpush1.bf16.msra.mxu0 %v857
  %1435 = vmatprep.subr.bf16.mxu0 0
  %1436 = vmatpush1.bf16.msra.mxu0 %v860
  %1437 = vmatprep.subr.bf16.mxu0 0
  %1438 = vmatpush1.bf16.msra.mxu0 %v863
  %1439 = vmatprep.subr.bf16.mxu0 0
  %1440 = vmatpush1.bf16.msra.mxu0 %v866
  %1441 = vmatprep.subr.bf16.mxu0 0
  %1442 = vmatpush1.bf16.msra.mxu0 %v869
  %1443 = vmatprep.subr.bf16.mxu0 0
  %1444 = vmatpush1.bf16.msra.mxu0 %v872
  %1445 = vmatprep.subr.bf16.mxu0 0
  %1446 = vmatpush1.bf16.msra.mxu0 %v875
  %1447 = vmatprep.subr.bf16.mxu0 0
  %1448 = vmatpush1.bf16.msra.mxu0 %v878
  %1449 = vmatprep.subr.bf16.mxu0 0
  %1450 = vmatpush1.bf16.msra.mxu0 %v881
  %1451 = vmatprep.subr.bf16.mxu0 0
  %1452 = vmatpush1.bf16.msra.mxu0 %v884
  %1453 = vmatprep.subr.bf16.mxu0 0
  %1454 = vmatpush1.bf16.msra.mxu0 %v887
  %1455 = vmatprep.subr.bf16.mxu0 0
  %1456 = vmatpush1.bf16.msra.mxu0 %v890
  %1457 = vmatprep.subr.bf16.mxu0 0
  %1458 = vmatpush1.bf16.msra.mxu0 %v893
  %1459 = vmatprep.subr.bf16.mxu0 0
  %1460 = vmatpush1.bf16.msra.mxu0 %v896
  %1461 = vmatprep.subr.bf16.mxu0 0
  %1462 = vmatpush1.bf16.msra.mxu0 %v899
  %1463 = vmatprep.subr.bf16.mxu0 0
  %1464 = vmatpush1.bf16.msra.mxu0 %v902
  %1465 = vmatprep.mubr.bf16.mxu0 %v408
  %1466 = vmatmul.mubr.bf16.gmra.mrb[0].mxu0 %v407
  %v1467 = vpop.f32.mrb[0].mxu0
  %v1468 = vadd.f32 0.0, %v1467
  %v1469 = vpop.f32.mrb[0].mxu0
  %v1470 = vpop.f32.mrb[0].mxu0
  %v1471 = vadd.f32 0.0, %v1470
  %v1472 = vpop.f32.mrb[0].mxu0
  %1473 = vmatprep.mubr.bf16.mxu0 %v412
  %1474 = vmatmul.mubr.bf16.gmra.mrb[0].mxu0 %v411
  %v1475 = vpop.f32.mrb[0].mxu0
  %v1476 = vadd.f32 0.0, %v1475
  %v1477 = vpop.f32.mrb[0].mxu0
  %v1478 = vpop.f32.mrb[0].mxu0
  %v1479 = vadd.f32 0.0, %v1478
  %v1480 = vpop.f32.mrb[0].mxu0
  %1481 = vmatprep.mubr.bf16.mxu0 %v416
  %1482 = vmatmul.mubr.bf16.gmra.mrb[0].mxu0 %v415
  %v1483 = vpop.f32.mrb[0].mxu0
  %v1484 = vadd.f32 0.0, %v1483
  %v1485 = vpop.f32.mrb[0].mxu0
  %v1486 = vpop.f32.mrb[0].mxu0
  %v1487 = vadd.f32 0.0, %v1486
  %v1488 = vpop.f32.mrb[0].mxu0
  %1489 = vmatprep.mubr.bf16.mxu0 %v420
  %1490 = vmatmul.mubr.bf16.gmra.mrb[0].mxu0 %v419
  %v1491 = vpop.f32.mrb[0].mxu0
  %v1492 = vadd.f32 0.0, %v1491
  %v1493 = vpop.f32.mrb[0].mxu0
  %v1494 = vpop.f32.mrb[0].mxu0
  %v1495 = vadd.f32 0.0, %v1494
  %v1496 = vpop.f32.mrb[0].mxu0
  %1497 = vmatprep.mubr.bf16.mxu0 %v424
  %1498 = vmatmul.mubr.bf16.gmra.mrb[0].mxu0 %v423
  %v1499 = vpop.f32.mrb[0].mxu0
  %v1500 = vadd.f32 0.0, %v1499
  %v1501 = vpop.f32.mrb[0].mxu0
  %v1502 = vpop.f32.mrb[0].mxu0
  %v1503 = vadd.f32 0.0, %v1502
  %v1504 = vpop.f32.mrb[0].mxu0
  %1505 = vmatprep.mubr.bf16.mxu0 %v428
  %1506 = vmatmul.mubr.bf16.gmra.mrb[0].mxu0 %v427
  %v1507 = vpop.f32.mrb[0].mxu0
  %v1508 = vadd.f32 0.0, %v1507
  %v1509 = vpop.f32.mrb[0].mxu0
  %v1510 = vpop.f32.mrb[0].mxu0
  %v1511 = vadd.f32 0.0, %v1510
  %v1512 = vpop.f32.mrb[0].mxu0
  %1513 = vmatprep.mubr.bf16.mxu0 %v432
  %1514 = vmatmul.mubr.bf16.gmra.mrb[0].mxu0 %v431
  %v1515 = vpop.f32.mrb[0].mxu0
  %v1516 = vadd.f32 0.0, %v1515
  %v1517 = vpop.f32.mrb[0].mxu0
  %v1518 = vpop.f32.mrb[0].mxu0
  %v1519 = vadd.f32 0.0, %v1518
  %v1520 = vpop.f32.mrb[0].mxu0
  %1521 = vmatprep.mubr.bf16.mxu0 %v436
  %1522 = vmatmul.mubr.bf16.gmra.mrb[0].mxu0 %v435
  %v1523 = vpop.f32.mrb[0].mxu0
  %v1524 = vadd.f32 0.0, %v1523
  %v1525 = vpop.f32.mrb[0].mxu0
  %v1526 = vpop.f32.mrb[0].mxu0
  %v1527 = vadd.f32 0.0, %v1526
  %v1528 = vpop.f32.mrb[0].mxu0
  %1529 = vmatprep.mubr.bf16.mxu0 %v440
  %1530 = vmatmul.mubr.bf16.gmra.mrb[0].mxu0 %v439
  %v1531 = vpop.f32.mrb[0].mxu0
  %v1532 = vadd.f32 0.0, %v1531
  %v1533 = vpop.f32.mrb[0].mxu0
  %v1534 = vpop.f32.mrb[0].mxu0
  %v1535 = vadd.f32 0.0, %v1534
  %v1536 = vpop.f32.mrb[0].mxu0
  %1537 = vmatprep.mubr.bf16.mxu0 %v444
  %1538 = vmatmul.mubr.bf16.gmra.mrb[0].mxu0 %v443
  %v1539 = vpop.f32.mrb[0].mxu0
  %v1540 = vadd.f32 0.0, %v1539
  %v1541 = vpop.f32.mrb[0].mxu0
  %v1542 = vpop.f32.mrb[0].mxu0
  %v1543 = vadd.f32 0.0, %v1542
  %v1544 = vpop.f32.mrb[0].mxu0
  %1545 = vmatprep.mubr.bf16.mxu0 %v448
  %1546 = vmatmul.mubr.bf16.gmra.mrb[0].mxu0 %v447
  %v1547 = vpop.f32.mrb[0].mxu0
  %v1548 = vadd.f32 0.0, %v1547
  %v1549 = vpop.f32.mrb[0].mxu0
  %v1550 = vpop.f32.mrb[0].mxu0
  %v1551 = vadd.f32 0.0, %v1550
  %v1552 = vpop.f32.mrb[0].mxu0
  %1553 = vmatprep.mubr.bf16.mxu0 %v452
  %1554 = vmatmul.mubr.bf16.gmra.mrb[0].mxu0 %v451
  %v1555 = vpop.f32.mrb[0].mxu0
  %v1556 = vadd.f32 0.0, %v1555
  %v1557 = vpop.f32.mrb[0].mxu0
  %v1558 = vpop.f32.mrb[0].mxu0
  %v1559 = vadd.f32 0.0, %v1558
  %v1560 = vpop.f32.mrb[0].mxu0
  %1561 = vmatprep.mubr.bf16.mxu0 %v456
  %1562 = vmatmul.mubr.bf16.gmra.mrb[0].mxu0 %v455
  %v1563 = vpop.f32.mrb[0].mxu0
  %v1564 = vadd.f32 0.0, %v1563
  %v1565 = vpop.f32.mrb[0].mxu0
  %v1566 = vpop.f32.mrb[0].mxu0
  %v1567 = vadd.f32 0.0, %v1566
  %v1568 = vpop.f32.mrb[0].mxu0
  %1569 = vmatprep.mubr.bf16.mxu0 %v460
  %1570 = vmatmul.mubr.bf16.gmra.mrb[0].mxu0 %v459
  %v1571 = vpop.f32.mrb[0].mxu0
  %v1572 = vadd.f32 0.0, %v1571
  %v1573 = vpop.f32.mrb[0].mxu0
  %v1574 = vpop.f32.mrb[0].mxu0
  %v1575 = vadd.f32 0.0, %v1574
  %v1576 = vpop.f32.mrb[0].mxu0
  %1577 = vmatprep.mubr.bf16.mxu0 %v464
  %1578 = vmatmul.mubr.bf16.gmra.mrb[0].mxu0 %v463
  %v1579 = vpop.f32.mrb[0].mxu0
  %v1580 = vadd.f32 0.0, %v1579
  %v1581 = vpop.f32.mrb[0].mxu0
  %v1582 = vpop.f32.mrb[0].mxu0
  %v1583 = vadd.f32 0.0, %v1582
  %v1584 = vpop.f32.mrb[0].mxu0
  %1585 = vmatprep.mubr.bf16.mxu0 %v468
  %1586 = vmatmul.mubr.bf16.gmra.mrb[0].mxu0 %v467
  %v1587 = vpop.f32.mrb[0].mxu0
  %v1588 = vadd.f32 0.0, %v1587
  %v1589 = vpop.f32.mrb[0].mxu0
  %v1590 = vpop.f32.mrb[0].mxu0
  %v1591 = vadd.f32 0.0, %v1590
  %v1592 = vpop.f32.mrb[0].mxu0
  %1593 = vdwg.mxu0
  %1594 = vmatprep.subr.bf16.mxu0 0
  %1595 = vmatpush1.bf16.msra.mxu0 %v905
  %1596 = vmatprep.subr.bf16.mxu0 0
  %1597 = vmatpush1.bf16.msra.mxu0 %v908
  %1598 = vmatprep.subr.bf16.mxu0 0
  %1599 = vmatpush1.bf16.msra.mxu0 %v911
  %1600 = vmatprep.subr.bf16.mxu0 0
  %1601 = vmatpush1.bf16.msra.mxu0 %v914
  %1602 = vmatprep.subr.bf16.mxu0 0
  %1603 = vmatpush1.bf16.msra.mxu0 %v917
  %1604 = vmatprep.subr.bf16.mxu0 0
  %1605 = vmatpush1.bf16.msra.mxu0 %v920
  %1606 = vmatprep.subr.bf16.mxu0 0
  %1607 = vmatpush1.bf16.msra.mxu0 %v923
  %1608 = vmatprep.subr.bf16.mxu0 0
  %1609 = vmatpush1.bf16.msra.mxu0 %v926
  %1610 = vmatprep.subr.bf16.mxu0 0
  %1611 = vmatpush1.bf16.msra.mxu0 %v929
  %1612 = vmatprep.subr.bf16.mxu0 0
  %1613 = vmatpush1.bf16.msra.mxu0 %v932
  %1614 = vmatprep.subr.bf16.mxu0 0
  %1615 = vmatpush1.bf16.msra.mxu0 %v935
  %1616 = vmatprep.subr.bf16.mxu0 0
  %1617 = vmatpush1.bf16.msra.mxu0 %v938
  %1618 = vmatprep.subr.bf16.mxu0 0
  %1619 = vmatpush1.bf16.msra.mxu0 %v941
  %1620 = vmatprep.subr.bf16.mxu0 0
  %1621 = vmatpush1.bf16.msra.mxu0 %v944
  %1622 = vmatprep.subr.bf16.mxu0 0
  %1623 = vmatpush1.bf16.msra.mxu0 %v947
  %1624 = vmatprep.subr.bf16.mxu0 0
  %1625 = vmatpush1.bf16.msra.mxu0 %v950
  %1626 = vmatprep.mubr.bf16.mxu0 %v410
  %1627 = vmatmul.mubr.bf16.gmra.mrb[0].mxu0 %v409
  %v1628 = vpop.f32.mrb[0].mxu0
  %v1629 = vadd.f32 %v1468, %v1628
  %v1630 = vpop.f32.mrb[0].mxu0
  %v1631 = vpop.f32.mrb[0].mxu0
  %v1632 = vadd.f32 %v1471, %v1631
  %v1633 = vpop.f32.mrb[0].mxu0
  %1634 = vmatprep.mubr.bf16.mxu0 %v414
  %1635 = vmatmul.mubr.bf16.gmra.mrb[0].mxu0 %v413
  %v1636 = vpop.f32.mrb[0].mxu0
  %v1637 = vadd.f32 %v1476, %v1636
  %v1638 = vpop.f32.mrb[0].mxu0
  %v1639 = vpop.f32.mrb[0].mxu0
  %v1640 = vadd.f32 %v1479, %v1639
  %v1641 = vpop.f32.mrb[0].mxu0
  %1642 = vmatprep.mubr.bf16.mxu0 %v418
  %1643 = vmatmul.mubr.bf16.gmra.mrb[0].mxu0 %v417
  %v1644 = vpop.f32.mrb[0].mxu0
  %v1645 = vadd.f32 %v1484, %v1644
  %v1646 = vpop.f32.mrb[0].mxu0
  %v1647 = vpop.f32.mrb[0].mxu0
  %v1648 = vadd.f32 %v1487, %v1647
  %v1649 = vpop.f32.mrb[0].mxu0
  %1650 = vmatprep.mubr.bf16.mxu0 %v422
  %1651 = vmatmul.mubr.bf16.gmra.mrb[0].mxu0 %v421
  %v1652 = vpop.f32.mrb[0].mxu0
  %v1653 = vadd.f32 %v1492, %v1652
  %v1654 = vpop.f32.mrb[0].mxu0
  %v1655 = vpop.f32.mrb[0].mxu0
  %v1656 = vadd.f32 %v1495, %v1655
  %v1657 = vpop.f32.mrb[0].mxu0
  %1658 = vmatprep.mubr.bf16.mxu0 %v426
  %1659 = vmatmul.mubr.bf16.gmra.mrb[0].mxu0 %v425
  %v1660 = vpop.f32.mrb[0].mxu0
  %v1661 = vadd.f32 %v1500, %v1660
  %v1662 = vpop.f32.mrb[0].mxu0
  %v1663 = vpop.f32.mrb[0].mxu0
  %v1664 = vadd.f32 %v1503, %v1663
  %v1665 = vpop.f32.mrb[0].mxu0
  %1666 = vmatprep.mubr.bf16.mxu0 %v430
  %1667 = vmatmul.mubr.bf16.gmra.mrb[0].mxu0 %v429
  %v1668 = vpop.f32.mrb[0].mxu0
  %v1669 = vadd.f32 %v1508, %v1668
  %v1670 = vpop.f32.mrb[0].mxu0
  %v1671 = vpop.f32.mrb[0].mxu0
  %v1672 = vadd.f32 %v1511, %v1671
  %v1673 = vpop.f32.mrb[0].mxu0
  %1674 = vmatprep.mubr.bf16.mxu0 %v434
  %1675 = vmatmul.mubr.bf16.gmra.mrb[0].mxu0 %v433
  %v1676 = vpop.f32.mrb[0].mxu0
  %v1677 = vadd.f32 %v1516, %v1676
  %v1678 = vpop.f32.mrb[0].mxu0
  %v1679 = vpop.f32.mrb[0].mxu0
  %v1680 = vadd.f32 %v1519, %v1679
  %v1681 = vpop.f32.mrb[0].mxu0
  %1682 = vmatprep.mubr.bf16.mxu0 %v438
  %1683 = vmatmul.mubr.bf16.gmra.mrb[0].mxu0 %v437
  %v1684 = vpop.f32.mrb[0].mxu0
  %v1685 = vadd.f32 %v1524, %v1684
  %v1686 = vpop.f32.mrb[0].mxu0
  %v1687 = vpop.f32.mrb[0].mxu0
  %v1688 = vadd.f32 %v1527, %v1687
  %v1689 = vpop.f32.mrb[0].mxu0
  %1690 = vmatprep.mubr.bf16.mxu0 %v442
  %1691 = vmatmul.mubr.bf16.gmra.mrb[0].mxu0 %v441
  %v1692 = vpop.f32.mrb[0].mxu0
  %v1693 = vadd.f32 %v1532, %v1692
  %v1694 = vpop.f32.mrb[0].mxu0
  %v1695 = vpop.f32.mrb[0].mxu0
  %v1696 = vadd.f32 %v1535, %v1695
  %v1697 = vpop.f32.mrb[0].mxu0
  %1698 = vmatprep.mubr.bf16.mxu0 %v446
  %1699 = vmatmul.mubr.bf16.gmra.mrb[0].mxu0 %v445
  %v1700 = vpop.f32.mrb[0].mxu0
  %v1701 = vadd.f32 %v1540, %v1700
  %v1702 = vpop.f32.mrb[0].mxu0
  %v1703 = vpop.f32.mrb[0].mxu0
  %v1704 = vadd.f32 %v1543, %v1703
  %v1705 = vpop.f32.mrb[0].mxu0
  %1706 = vmatprep.mubr.bf16.mxu0 %v450
  %1707 = vmatmul.mubr.bf16.gmra.mrb[0].mxu0 %v449
  %v1708 = vpop.f32.mrb[0].mxu0
  %v1709 = vadd.f32 %v1548, %v1708
  %v1710 = vpop.f32.mrb[0].mxu0
  %v1711 = vpop.f32.mrb[0].mxu0
  %v1712 = vadd.f32 %v1551, %v1711
  %v1713 = vpop.f32.mrb[0].mxu0
  %1714 = vmatprep.mubr.bf16.mxu0 %v454
  %1715 = vmatmul.mubr.bf16.gmra.mrb[0].mxu0 %v453
  %v1716 = vpop.f32.mrb[0].mxu0
  %v1717 = vadd.f32 %v1556, %v1716
  %v1718 = vpop.f32.mrb[0].mxu0
  %v1719 = vpop.f32.mrb[0].mxu0
  %v1720 = vadd.f32 %v1559, %v1719
  %v1721 = vpop.f32.mrb[0].mxu0
  %1722 = vmatprep.mubr.bf16.mxu0 %v458
  %1723 = vmatmul.mubr.bf16.gmra.mrb[0].mxu0 %v457
  %v1724 = vpop.f32.mrb[0].mxu0
  %v1725 = vadd.f32 %v1564, %v1724
  %v1726 = vpop.f32.mrb[0].mxu0
  %v1727 = vpop.f32.mrb[0].mxu0
  %v1728 = vadd.f32 %v1567, %v1727
  %v1729 = vpop.f32.mrb[0].mxu0
  %1730 = vmatprep.mubr.bf16.mxu0 %v462
  %1731 = vmatmul.mubr.bf16.gmra.mrb[0].mxu0 %v461
  %v1732 = vpop.f32.mrb[0].mxu0
  %v1733 = vadd.f32 %v1572, %v1732
  %v1734 = vpop.f32.mrb[0].mxu0
  %v1735 = vpop.f32.mrb[0].mxu0
  %v1736 = vadd.f32 %v1575, %v1735
  %v1737 = vpop.f32.mrb[0].mxu0
  %1738 = vmatprep.mubr.bf16.mxu0 %v466
  %1739 = vmatmul.mubr.bf16.gmra.mrb[0].mxu0 %v465
  %v1740 = vpop.f32.mrb[0].mxu0
  %v1741 = vadd.f32 %v1580, %v1740
  %v1742 = vpop.f32.mrb[0].mxu0
  %v1743 = vpop.f32.mrb[0].mxu0
  %v1744 = vadd.f32 %v1583, %v1743
  %v1745 = vpop.f32.mrb[0].mxu0
  %1746 = vmatprep.mubr.bf16.mxu0 %v470
  %1747 = vmatmul.mubr.bf16.gmra.mrb[0].mxu0 %v469
  %v1748 = vpop.f32.mrb[0].mxu0
  %v1749 = vadd.f32 %v1588, %v1748
  %v1750 = vpop.f32.mrb[0].mxu0
  %v1751 = vpop.f32.mrb[0].mxu0
  %v1752 = vadd.f32 %v1591, %v1751
  %v1753 = vpop.f32.mrb[0].mxu0
  %1754 = vdwg.mxu0
  %vm1787 = vcmask 1040384
  %v1788 = vrot.slane %v1275, 7
  %v1789 = vrot.slane %v1279, 7
  %v1790 = vsel %vm1787, %v1788, %v1789
  %v1791 = vrot.slane %v1285, 7
  %v1792 = vrot.slane %v1289, 7
  %v1793 = vsel %vm1787, %v1791, %v1792
  %v1794 = vrot.slane %v1295, 7
  %v1795 = vrot.slane %v1299, 7
  %v1796 = vsel %vm1787, %v1794, %v1795
  %v1797 = vrot.slane %v1305, 7
  %v1798 = vrot.slane %v1309, 7
  %v1799 = vsel %vm1787, %v1797, %v1798
  %v1800 = vrot.slane %v1315, 7
  %v1801 = vrot.slane %v1319, 7
  %v1802 = vsel %vm1787, %v1800, %v1801
  %v1803 = vrot.slane %v1325, 7
  %v1804 = vrot.slane %v1329, 7
  %v1805 = vsel %vm1787, %v1803, %v1804
  %v1806 = vrot.slane %v1335, 7
  %v1807 = vrot.slane %v1339, 7
  %v1808 = vsel %vm1787, %v1806, %v1807
  %v1809 = vrot.slane %v1345, 7
  %v1810 = vrot.slane %v1349, 7
  %v1811 = vsel %vm1787, %v1809, %v1810
  %v1812 = vrot.slane %v1355, 7
  %v1813 = vrot.slane %v1359, 7
  %v1814 = vsel %vm1787, %v1812, %v1813
  %v1815 = vrot.slane %v1365, 7
  %v1816 = vrot.slane %v1369, 7
  %v1817 = vsel %vm1787, %v1815, %v1816
  %v1818 = vrot.slane %v1375, 7
  %v1819 = vrot.slane %v1379, 7
  %v1820 = vsel %vm1787, %v1818, %v1819
  %v1821 = vrot.slane %v1385, 7
  %v1822 = vrot.slane %v1389, 7
  %v1823 = vsel %vm1787, %v1821, %v1822
  %v1824 = vrot.slane %v1395, 7
  %v1825 = vrot.slane %v1399, 7
  %v1826 = vsel %vm1787, %v1824, %v1825
  %v1827 = vrot.slane %v1405, 7
  %v1828 = vrot.slane %v1409, 7
  %v1829 = vsel %vm1787, %v1827, %v1828
  %v1830 = vrot.slane %v1415, 7
  %v1831 = vrot.slane %v1419, 7
  %v1832 = vsel %vm1787, %v1830, %v1831
  %v1833 = vrot.slane %v1425, 7
  %v1834 = vrot.slane %v1429, 7
  %v1835 = vsel %vm1787, %v1833, %v1834
  %v1868 = vsel %vm1787, 0.0, %v1788
  %v1869 = vsel %vm1787, 0.0, %v1791
  %v1870 = vsel %vm1787, 0.0, %v1794
  %v1871 = vsel %vm1787, 0.0, %v1797
  %v1872 = vsel %vm1787, 0.0, %v1800
  %v1873 = vsel %vm1787, 0.0, %v1803
  %v1874 = vsel %vm1787, 0.0, %v1806
  %v1875 = vsel %vm1787, 0.0, %v1809
  %v1876 = vsel %vm1787, 0.0, %v1812
  %v1877 = vsel %vm1787, 0.0, %v1815
  %v1878 = vsel %vm1787, 0.0, %v1818
  %v1879 = vsel %vm1787, 0.0, %v1821
  %v1880 = vsel %vm1787, 0.0, %v1824
  %v1881 = vsel %vm1787, 0.0, %v1827
  %v1882 = vsel %vm1787, 0.0, %v1830
  %v1883 = vsel %vm1787, 0.0, %v1833
  %v1884 = vadd.f32 %v1868, %v1277
  %v1885 = vadd.f32 %v1790, %v1281
  %v1886 = vadd.f32 %v1869, %v1287
  %v1887 = vadd.f32 %v1793, %v1291
  %v1888 = vadd.f32 %v1870, %v1297
  %v1889 = vadd.f32 %v1796, %v1301
  %v1890 = vadd.f32 %v1871, %v1307
  %v1891 = vadd.f32 %v1799, %v1311
  %v1892 = vadd.f32 %v1872, %v1317
  %v1893 = vadd.f32 %v1802, %v1321
  %v1894 = vadd.f32 %v1873, %v1327
  %v1895 = vadd.f32 %v1805, %v1331
  %v1896 = vadd.f32 %v1874, %v1337
  %v1897 = vadd.f32 %v1808, %v1341
  %v1898 = vadd.f32 %v1875, %v1347
  %v1899 = vadd.f32 %v1811, %v1351
  %v1900 = vadd.f32 %v1876, %v1357
  %v1901 = vadd.f32 %v1814, %v1361
  %v1902 = vadd.f32 %v1877, %v1367
  %v1903 = vadd.f32 %v1817, %v1371
  %v1904 = vadd.f32 %v1878, %v1377
  %v1905 = vadd.f32 %v1820, %v1381
  %v1906 = vadd.f32 %v1879, %v1387
  %v1907 = vadd.f32 %v1823, %v1391
  %v1908 = vadd.f32 %v1880, %v1397
  %v1909 = vadd.f32 %v1826, %v1401
  %v1910 = vadd.f32 %v1881, %v1407
  %v1911 = vadd.f32 %v1829, %v1411
  %v1912 = vadd.f32 %v1882, %v1417
  %v1913 = vadd.f32 %v1832, %v1421
  %v1914 = vadd.f32 %v1883, %v1427
  %v1915 = vadd.f32 %v1835, %v1431
  %vm1948 = vcmask 1046528
  %v1949 = vrot.slane %v1629, 1
  %v1950 = vrot.slane %v1632, 1
  %v1951 = vsel %vm1948, %v1949, %v1950
  %v1952 = vrot.slane %v1637, 1
  %v1953 = vrot.slane %v1640, 1
  %v1954 = vsel %vm1948, %v1952, %v1953
  %v1955 = vrot.slane %v1645, 1
  %v1956 = vrot.slane %v1648, 1
  %v1957 = vsel %vm1948, %v1955, %v1956
  %v1958 = vrot.slane %v1653, 1
  %v1959 = vrot.slane %v1656, 1
  %v1960 = vsel %vm1948, %v1958, %v1959
  %v1961 = vrot.slane %v1661, 1
  %v1962 = vrot.slane %v1664, 1
  %v1963 = vsel %vm1948, %v1961, %v1962
  %v1964 = vrot.slane %v1669, 1
  %v1965 = vrot.slane %v1672, 1
  %v1966 = vsel %vm1948, %v1964, %v1965
  %v1967 = vrot.slane %v1677, 1
  %v1968 = vrot.slane %v1680, 1
  %v1969 = vsel %vm1948, %v1967, %v1968
  %v1970 = vrot.slane %v1685, 1
  %v1971 = vrot.slane %v1688, 1
  %v1972 = vsel %vm1948, %v1970, %v1971
  %v1973 = vrot.slane %v1693, 1
  %v1974 = vrot.slane %v1696, 1
  %v1975 = vsel %vm1948, %v1973, %v1974
  %v1976 = vrot.slane %v1701, 1
  %v1977 = vrot.slane %v1704, 1
  %v1978 = vsel %vm1948, %v1976, %v1977
  %v1979 = vrot.slane %v1709, 1
  %v1980 = vrot.slane %v1712, 1
  %v1981 = vsel %vm1948, %v1979, %v1980
  %v1982 = vrot.slane %v1717, 1
  %v1983 = vrot.slane %v1720, 1
  %v1984 = vsel %vm1948, %v1982, %v1983
  %v1985 = vrot.slane %v1725, 1
  %v1986 = vrot.slane %v1728, 1
  %v1987 = vsel %vm1948, %v1985, %v1986
  %v1988 = vrot.slane %v1733, 1
  %v1989 = vrot.slane %v1736, 1
  %v1990 = vsel %vm1948, %v1988, %v1989
  %v1991 = vrot.slane %v1741, 1
  %v1992 = vrot.slane %v1744, 1
  %v1993 = vsel %vm1948, %v1991, %v1992
  %v1994 = vrot.slane %v1749, 1
  %v1995 = vrot.slane %v1752, 1
  %v1996 = vsel %vm1948, %v1994, %v1995
  %v2029 = vsel %vm1948, %v1950, 0.0
  %v2030 = vsel %vm1948, %v1953, 0.0
  %v2031 = vsel %vm1948, %v1956, 0.0
  %v2032 = vsel %vm1948, %v1959, 0.0
  %v2033 = vsel %vm1948, %v1962, 0.0
  %v2034 = vsel %vm1948, %v1965, 0.0
  %v2035 = vsel %vm1948, %v1968, 0.0
  %v2036 = vsel %vm1948, %v1971, 0.0
  %v2037 = vsel %vm1948, %v1974, 0.0
  %v2038 = vsel %vm1948, %v1977, 0.0
  %v2039 = vsel %vm1948, %v1980, 0.0
  %v2040 = vsel %vm1948, %v1983, 0.0
  %v2041 = vsel %vm1948, %v1986, 0.0
  %v2042 = vsel %vm1948, %v1989, 0.0
  %v2043 = vsel %vm1948, %v1992, 0.0
  %v2044 = vsel %vm1948, %v1995, 0.0
  %v2045 = vadd.f32 %v1884, %v1951
  %v2046 = vadd.f32 %v1885, %v2029
  %v2047 = vadd.f32 %v1886, %v1954
  %v2048 = vadd.f32 %v1887, %v2030
  %v2049 = vadd.f32 %v1888, %v1957
  %v2050 = vadd.f32 %v1889, %v2031
  %v2051 = vadd.f32 %v1890, %v1960
  %v2052 = vadd.f32 %v1891, %v2032
  %v2053 = vadd.f32 %v1892, %v1963
  %v2054 = vadd.f32 %v1893, %v2033
  %v2055 = vadd.f32 %v1894, %v1966
  %v2056 = vadd.f32 %v1895, %v2034
  %v2057 = vadd.f32 %v1896, %v1969
  %v2058 = vadd.f32 %v1897, %v2035
  %v2059 = vadd.f32 %v1898, %v1972
  %v2060 = vadd.f32 %v1899, %v2036
  %v2061 = vadd.f32 %v1900, %v1975
  %v2062 = vadd.f32 %v1901, %v2037
  %v2063 = vadd.f32 %v1902, %v1978
  %v2064 = vadd.f32 %v1903, %v2038
  %v2065 = vadd.f32 %v1904, %v1981
  %v2066 = vadd.f32 %v1905, %v2039
  %v2067 = vadd.f32 %v1906, %v1984
  %v2068 = vadd.f32 %v1907, %v2040
  %v2069 = vadd.f32 %v1908, %v1987
  %v2070 = vadd.f32 %v1909, %v2041
  %v2071 = vadd.f32 %v1910, %v1990
  %v2072 = vadd.f32 %v1911, %v2042
  %v2073 = vadd.f32 %v1912, %v1993
  %v2074 = vadd.f32 %v1913, %v2043
  %v2075 = vadd.f32 %v1914, %v1996
  %v2076 = vadd.f32 %v1915, %v2044
  %v2077 = vmax.f32 %v2045, %v2046
  %v2078 = vrot.slane %v2077, 4
  %v2079 = vmax.f32 %v2077, %v2078
  %v2080 = vrot.slane %v2079, 2
  %v2081 = vmax.f32 %v2079, %v2080
  %v2082 = vrot.slane %v2081, 1
  %v2083 = vmax.f32 %v2081, %v2082
  %v2084 = vmax.f32 %v2047, %v2048
  %v2085 = vrot.slane %v2084, 4
  %v2086 = vmax.f32 %v2084, %v2085
  %v2087 = vrot.slane %v2086, 2
  %v2088 = vmax.f32 %v2086, %v2087
  %v2089 = vrot.slane %v2088, 1
  %v2090 = vmax.f32 %v2088, %v2089
  %v2091 = vmax.f32 %v2049, %v2050
  %v2092 = vrot.slane %v2091, 4
  %v2093 = vmax.f32 %v2091, %v2092
  %v2094 = vrot.slane %v2093, 2
  %v2095 = vmax.f32 %v2093, %v2094
  %v2096 = vrot.slane %v2095, 1
  %v2097 = vmax.f32 %v2095, %v2096
  %v2098 = vmax.f32 %v2051, %v2052
  %v2099 = vrot.slane %v2098, 4
  %v2100 = vmax.f32 %v2098, %v2099
  %v2101 = vrot.slane %v2100, 2
  %v2102 = vmax.f32 %v2100, %v2101
  %v2103 = vrot.slane %v2102, 1
  %v2104 = vmax.f32 %v2102, %v2103
  %v2105 = vmax.f32 %v2053, %v2054
  %v2106 = vrot.slane %v2105, 4
  %v2107 = vmax.f32 %v2105, %v2106
  %v2108 = vrot.slane %v2107, 2
  %v2109 = vmax.f32 %v2107, %v2108
  %v2110 = vrot.slane %v2109, 1
  %v2111 = vmax.f32 %v2109, %v2110
  %v2112 = vmax.f32 %v2055, %v2056
  %v2113 = vrot.slane %v2112, 4
  %v2114 = vmax.f32 %v2112, %v2113
  %v2115 = vrot.slane %v2114, 2
  %v2116 = vmax.f32 %v2114, %v2115
  %v2117 = vrot.slane %v2116, 1
  %v2118 = vmax.f32 %v2116, %v2117
  %v2119 = vmax.f32 %v2057, %v2058
  %v2120 = vrot.slane %v2119, 4
  %v2121 = vmax.f32 %v2119, %v2120
  %v2122 = vrot.slane %v2121, 2
  %v2123 = vmax.f32 %v2121, %v2122
  %v2124 = vrot.slane %v2123, 1
  %v2125 = vmax.f32 %v2123, %v2124
  %v2126 = vmax.f32 %v2059, %v2060
  %v2127 = vrot.slane %v2126, 4
  %v2128 = vmax.f32 %v2126, %v2127
  %v2129 = vrot.slane %v2128, 2
  %v2130 = vmax.f32 %v2128, %v2129
  %v2131 = vrot.slane %v2130, 1
  %v2132 = vmax.f32 %v2130, %v2131
  %v2133 = vmax.f32 %v2061, %v2062
  %v2134 = vrot.slane %v2133, 4
  %v2135 = vmax.f32 %v2133, %v2134
  %v2136 = vrot.slane %v2135, 2
  %v2137 = vmax.f32 %v2135, %v2136
  %v2138 = vrot.slane %v2137, 1
  %v2139 = vmax.f32 %v2137, %v2138
  %v2140 = vmax.f32 %v2063, %v2064
  %v2141 = vrot.slane %v2140, 4
  %v2142 = vmax.f32 %v2140, %v2141
  %v2143 = vrot.slane %v2142, 2
  %v2144 = vmax.f32 %v2142, %v2143
  %v2145 = vrot.slane %v2144, 1
  %v2146 = vmax.f32 %v2144, %v2145
  %v2147 = vmax.f32 %v2065, %v2066
  %v2148 = vrot.slane %v2147, 4
  %v2149 = vmax.f32 %v2147, %v2148
  %v2150 = vrot.slane %v2149, 2
  %v2151 = vmax.f32 %v2149, %v2150
  %v2152 = vrot.slane %v2151, 1
  %v2153 = vmax.f32 %v2151, %v2152
  %v2154 = vmax.f32 %v2067, %v2068
  %v2155 = vrot.slane %v2154, 4
  %v2156 = vmax.f32 %v2154, %v2155
  %v2157 = vrot.slane %v2156, 2
  %v2158 = vmax.f32 %v2156, %v2157
  %v2159 = vrot.slane %v2158, 1
  %v2160 = vmax.f32 %v2158, %v2159
  %v2161 = vmax.f32 %v2069, %v2070
  %v2162 = vrot.slane %v2161, 4
  %v2163 = vmax.f32 %v2161, %v2162
  %v2164 = vrot.slane %v2163, 2
  %v2165 = vmax.f32 %v2163, %v2164
  %v2166 = vrot.slane %v2165, 1
  %v2167 = vmax.f32 %v2165, %v2166
  %v2168 = vmax.f32 %v2071, %v2072
  %v2169 = vrot.slane %v2168, 4
  %v2170 = vmax.f32 %v2168, %v2169
  %v2171 = vrot.slane %v2170, 2
  %v2172 = vmax.f32 %v2170, %v2171
  %v2173 = vrot.slane %v2172, 1
  %v2174 = vmax.f32 %v2172, %v2173
  %v2175 = vmax.f32 %v2073, %v2074
  %v2176 = vrot.slane %v2175, 4
  %v2177 = vmax.f32 %v2175, %v2176
  %v2178 = vrot.slane %v2177, 2
  %v2179 = vmax.f32 %v2177, %v2178
  %v2180 = vrot.slane %v2179, 1
  %v2181 = vmax.f32 %v2179, %v2180
  %v2182 = vmax.f32 %v2075, %v2076
  %v2183 = vrot.slane %v2182, 4
  %v2184 = vmax.f32 %v2182, %v2183
  %v2185 = vrot.slane %v2184, 2
  %v2186 = vmax.f32 %v2184, %v2185
  %v2187 = vrot.slane %v2186, 1
  %v2188 = vmax.f32 %v2186, %v2187
  %v2189 = vld [vmem:[%s2] sm:$0x1]
  %v2191 = vlaneseq
  %v2192 = vshrl.u32 %v2191, 7
  %v2193 = vsub.s32 0, %v2192
  %v2194 = vrot.slane %v2189, %v2193
  %v2196 = vadd.f32 %v2083, %v2194
  %v2197 = vadd.f32 %v2090, %v2194
  %v2198 = vadd.f32 %v2097, %v2194
  %v2199 = vadd.f32 %v2104, %v2194
  %v2200 = vadd.f32 %v2111, %v2194
  %v2201 = vadd.f32 %v2118, %v2194
  %v2202 = vadd.f32 %v2125, %v2194
  %v2203 = vadd.f32 %v2132, %v2194
  %v2204 = vadd.f32 %v2139, %v2194
  %v2205 = vadd.f32 %v2146, %v2194
  %v2206 = vadd.f32 %v2153, %v2194
  %v2207 = vadd.f32 %v2160, %v2194
  %v2208 = vadd.f32 %v2167, %v2194
  %v2209 = vadd.f32 %v2174, %v2194
  %v2210 = vadd.f32 %v2181, %v2194
  %v2211 = vadd.f32 %v2188, %v2194
  %v2212 = vmax.f32 %v2196, 0.0
  %v2213 = vmax.f32 %v2197, 0.0
  %v2214 = vmax.f32 %v2198, 0.0
  %v2215 = vmax.f32 %v2199, 0.0
  %v2216 = vmax.f32 %v2200, 0.0
  %v2217 = vmax.f32 %v2201, 0.0
  %v2218 = vmax.f32 %v2202, 0.0
  %v2219 = vmax.f32 %v2203, 0.0
  %v2220 = vmax.f32 %v2204, 0.0
  %v2221 = vmax.f32 %v2205, 0.0
  %v2222 = vmax.f32 %v2206, 0.0
  %v2223 = vmax.f32 %v2207, 0.0
  %v2224 = vmax.f32 %v2208, 0.0
  %v2225 = vmax.f32 %v2209, 0.0
  %v2226 = vmax.f32 %v2210, 0.0
  %v2227 = vmax.f32 %v2211, 0.0
  %v2228 = vld [vmem:[%s3] sm:$0x1]
  %v2230 = vlaneseq
  %v2231 = vshrl.u32 %v2230, 7
  %v2232 = vsub.s32 0, %v2231
  %v2233 = vrot.slane %v2228, %v2232
  %v2235 = vmul.f32 %v2212, %v2233
  %v2236 = vmul.f32 %v2213, %v2233
  %v2237 = vmul.f32 %v2214, %v2233
  %v2238 = vmul.f32 %v2215, %v2233
  %v2239 = vmul.f32 %v2216, %v2233
  %v2240 = vmul.f32 %v2217, %v2233
  %v2241 = vmul.f32 %v2218, %v2233
  %v2242 = vmul.f32 %v2219, %v2233
  %v2243 = vmul.f32 %v2220, %v2233
  %v2244 = vmul.f32 %v2221, %v2233
  %v2245 = vmul.f32 %v2222, %v2233
  %v2246 = vmul.f32 %v2223, %v2233
  %v2247 = vmul.f32 %v2224, %v2233
  %v2248 = vmul.f32 %v2225, %v2233
  %v2249 = vmul.f32 %v2226, %v2233
  %v2250 = vmul.f32 %v2227, %v2233
  %v2267 = vrot.slane %v2236, 7
  %vm2268 = vcmask 1041409
  %v2269 = vsel %vm2268, %v2267, %v2235
  %v2270 = vrot.slane %v2237, 6
  %vm2271 = vcmask 1042434
  %v2272 = vsel %vm2271, %v2270, %v2269
  %v2273 = vrot.slane %v2238, 5
  %vm2274 = vcmask 1043459
  %v2275 = vsel %vm2274, %v2273, %v2272
  %v2276 = vrot.slane %v2239, 4
  %vm2277 = vcmask 1044484
  %v2278 = vsel %vm2277, %v2276, %v2275
  %v2279 = vrot.slane %v2240, 3
  %vm2280 = vcmask 1045509
  %v2281 = vsel %vm2280, %v2279, %v2278
  %v2282 = vrot.slane %v2241, 2
  %vm2283 = vcmask 1046534
  %v2284 = vsel %vm2283, %v2282, %v2281
  %v2285 = vrot.slane %v2242, 1
  %vm2286 = vcmask 1047559
  %v2287 = vsel %vm2286, %v2285, %v2284
  %v2288 = vrot.slane %v2244, 7
  %v2289 = vsel %vm2268, %v2288, %v2243
  %v2290 = vrot.slane %v2245, 6
  %v2291 = vsel %vm2271, %v2290, %v2289
  %v2292 = vrot.slane %v2246, 5
  %v2293 = vsel %vm2274, %v2292, %v2291
  %v2294 = vrot.slane %v2247, 4
  %v2295 = vsel %vm2277, %v2294, %v2293
  %v2296 = vrot.slane %v2248, 3
  %v2297 = vsel %vm2280, %v2296, %v2295
  %v2298 = vrot.slane %v2249, 2
  %v2299 = vsel %vm2283, %v2298, %v2297
  %v2300 = vrot.slane %v2250, 1
  %v2301 = vsel %vm2286, %v2300, %v2299
  %2304 = vadd.xlane.f32.xlu0 %v2287
  %v2305 = vpop.xlane.xlu0 %2304
  %2306 = vadd.xlane.f32.xlu0 %v2301
  %v2307 = vpop.xlane.xlu0 %2306
  %v2308 = vld [vmem:[#allocation2] sm:$0x1]
  %v2310 = vlaneseq
  %v2311 = vshrl.u32 %v2310, 7
  %v2312 = vsub.s32 0, %v2311
  %v2313 = vrot.slane %v2308, %v2312
  %v2315 = vadd.f32 %v2305, %v2313
  %v2316 = vadd.f32 %v2307, %v2313
  %vm2317 = vcmask 7168
  %2318 = vst.msk [vmem:[%s5] sm:$0xff] %vm2317, %v2315
  %2319 = vst.msk [vmem:[%s5 + $0x8] sm:$0xff] %vm2317, %v2316
  // Predicated region
  $region22: #{intro1dcnn_forward.1} parent=0 // pred_check
    _
  $region23: #{intro1dcnn_forward.1} parent=0 // pred_check_branch
    %2321 = sbr.rel (0) target = $region25
  $region24: #{intro1dcnn_forward.1} parent=0 // pred_region
    _
  $region25: #{intro1dcnn_forward.1} parent=0 // pred_fallthru
    _
  // Predicated region
  $region26: #{intro1dcnn_forward.1} parent=0 // pred_check
    _
  $region27: #{intro1dcnn_forward.1} parent=0 // pred_check_branch
    %2323 = sbr.rel (0) target = $region29
  $region28: #{intro1dcnn_forward.1} parent=0 // pred_region
    _
  $region29: #{intro1dcnn_forward.1} parent=0 // pred_fallthru
    _

</llo_original>
